<compile_context>
chip_gen: v7x
topology: tpu7x:2x2x1
jax: 0.10.0
libtpu: 0.0.40
codegen_flags: <defaults>
</compile_context>

<pallas_src>
import functools
import math

import jax
import jax.numpy as jnp
from jax import lax
from jax.experimental import pallas as pl
from jax.experimental.pallas import tpu as pltpu

# dtype of the one-hot gather matmul operands (accumulation stays f32).
# Flip to jnp.float32 if bit-accuracy vs. an f32 reference is required.
_GATHER_DTYPE = jnp.bfloat16


def _tile(n, cap):
    """Largest divisor of n that is <= cap and a multiple of 8 (else n)."""
    if n <= cap:
        return n
    for t in range(cap, 7, -1):
        if n % t == 0 and t % 8 == 0:
            return t
    return n


# ----------------------------------------------------------------------------
# Kernel 1: fused projections.
#   y_h = x @ W1_h   (all heads in ONE wide matmul  x @ [W1_0|...|W1_{H-1}])
#   z_h = y_h @ W2a_h   (neighbor half of conv2, hoisted out of the k loop)
#   c_h = y_h @ W2b_h   (center   half of conv2)
# Stored per head as a (TP, 3C) slab [y | z | c]  ->  yzc: (B, H, N, 3C).
# ----------------------------------------------------------------------------
def _proj_kernel(x_ref, w1_ref, w2a_ref, w2b_ref, yzc_ref):
    H, C = w2a_ref.shape[0], w2a_ref.shape[1]
    x = x_ref[0]                                              # (TP, Cin)
    y_all = jnp.dot(x, w1_ref[...],
                    preferred_element_type=jnp.float32)       # (TP, H*C)
    for h in range(H):                                        # H small & static
        yh = y_all[:, h * C:(h + 1) * C]
        zh = jnp.dot(yh, w2a_ref[h], preferred_element_type=jnp.float32)
        ch = jnp.dot(yh, w2b_ref[h], preferred_element_type=jnp.float32)
        yzc_ref[0, h] = jnp.concatenate([yh, zh, ch], axis=-1)


# ----------------------------------------------------------------------------
# Kernel 2: per (batch, query-tile, head) fused k-NN + gather + attention.
# Output block (1, TQ, H*C) is revisited across the (innermost, 'arbitrary')
# head axis; each head adds its C lanes, the block is flushed densely once.
# ----------------------------------------------------------------------------
def _gat_kernel(full_ref, q_ref, o_ref, *, k):
    # full_ref: (1, 1, N, 3C)   [y | y@w2a | y@w2b] for all points of head h
    # q_ref   : (1, 1, TQ, 3C)  same, restricted to this query row tile
    # o_ref   : (1, TQ, H*C)    lane-dense output block (accumulated over heads)
    N, W = full_ref.shape[2], full_ref.shape[3]
    C = W // 3
    TQ = q_ref.shape[2]
    HC = o_ref.shape[2]
    qt = pl.program_id(1)
    h = pl.program_id(2)

    @pl.when(h == 0)
    def _init():
        o_ref[...] = jnp.zeros_like(o_ref)

    blk = full_ref[0, 0]                                     # (N, 3C) f32
    qblk = q_ref[0, 0]                                       # (TQ, 3C)
    y_all = blk[:, :C]                                       # keys
    nz_all = blk[:, :2 * C].astype(_GATHER_DTYPE)            # gather RHS [y|z]
    yq = qblk[:, :C]                                         # query features
    cq = qblk[:, 2 * C:]                                     # center logit term

    # Squared-distance rows.  The row-constant |y_i|^2 is dropped (it does not
    # affect the per-row neighbor ranking).  d[i,j] = |y_j|^2 - 2 y_i.y_j is
    # computed as one augmented matmul -> no (N,1)->(1,N) transpose needed.
    sq = jnp.sum(y_all * y_all, axis=-1, keepdims=True)      # (N, 1)
    a_aug = jnp.concatenate(
        [yq * (-2.0), jnp.ones((TQ, 1), jnp.float32)], axis=-1)   # (TQ, C+1)
    b_aug = jnp.concatenate([y_all, sq], axis=-1)                 # (N,  C+1)
    d = jnp.einsum("qc,nc->qn", a_aug, b_aug,
                   preferred_element_type=jnp.float32)            # (TQ, N)

    colf = lax.broadcasted_iota(jnp.int32, (TQ, N), 1).astype(jnp.float32)
    rowf = (lax.broadcasted_iota(jnp.int32, (TQ, N), 0)
            + qt * TQ).astype(jnp.float32)
    # Exact self-inclusion (torch knn always includes the point itself).
    d = jnp.where(colf == rowf, -1e30, d)

    m0 = jnp.full((TQ, C), -1e30, jnp.float32)
    den0 = jnp.zeros((TQ, C), jnp.float32)
    acc0 = jnp.zeros((TQ, C), jnp.float32)

    def body(_, carry):
        d, m, den, acc = carry
        # masked argmin over the key axis (lowest index wins ties)
        mn = jnp.min(d, axis=-1, keepdims=True)
        cand = jnp.where(d <= mn, colf, jnp.float32(N))
        jsel = jnp.min(cand, axis=-1, keepdims=True)
        oh = colf == jsel                                    # one hit per row
        d = jnp.where(oh, 1e30, d)                           # exclude next pass
        # fused gather: neighbor features AND their w2a logit contribution in
        # one (TQ, N) @ (N, 2C) matmul (bf16 operands, f32 accumulation).
        ohm = oh.astype(jnp.float32).astype(_GATHER_DTYPE)
        g = jnp.dot(ohm, nz_all, preferred_element_type=jnp.float32)
        nj = g[:, :C]
        lj = g[:, C:] + cq
        lj = jnp.where(lj > 0.0, lj, 0.2 * lj)               # leaky relu
        # online softmax over the k neighbors (per point, per channel)
        m_new = jnp.maximum(m, lj)
        alpha = jnp.exp(m - m_new)
        p = jnp.exp(lj - m_new)
        return d, m_new, alpha * den + p, alpha * acc + p * nj

    _, _, den, acc = lax.fori_loop(0, k, body, (d, m0, den0, acc0), unroll=True)
    out_h = acc / den
    # ELU of the 'concat' aggregator (elementwise -> per-head is equivalent).
    out_h = jnp.where(out_h > 0.0, out_h,
                      jnp.exp(jnp.minimum(out_h, 0.0)) - 1.0)

    # Place this head's (TQ, C) result into lanes [h*C, (h+1)*C) of the dense
    # (TQ, H*C) block via a tiny one-hot matmul; heads touch disjoint lanes and
    # the HBM writeback of the block is a single dense store.
    rc = lax.broadcasted_iota(jnp.int32, (C, HC), 0)
    cc = lax.broadcasted_iota(jnp.int32, (C, HC), 1)
    place = (cc == rc + h * C).astype(jnp.float32)
    o_ref[0] = o_ref[0] + jnp.dot(out_h, place,
                                  preferred_element_type=jnp.float32)


# ----------------------------------------------------------------------------
# Wrapper
# ----------------------------------------------------------------------------
def multihead_graph_attention(x, w1, w2, k, *, point_tile=1024, query_tile=256):
    """x: (B, N, Cin) f32, w1: (H, Cin, C), w2: (H, 2C, C) -> (B, N, H*C)."""
    B, N, Cin = x.shape
    H, _, C = w1.shape
    HC = H * C
    assert w2.shape == (H, 2 * C, C)
    assert 0 < k <= N

    TP = _tile(N, point_tile)      # kernel-1 point tile
    TQ = _tile(N, query_tile)      # kernel-2 query-row tile

    # [W1_0 | ... | W1_{H-1}] : (Cin, H*C)
    w1_all = jnp.transpose(w1, (1, 0, 2)).reshape(Cin, HC)
    w2a = w2[:, :C, :]             # acts on neighbor features
    w2b = w2[:, C:, :]             # acts on center features

    yzc = pl.pallas_call(
        _proj_kernel,
        out_shape=jax.ShapeDtypeStruct((B, H, N, 3 * C), jnp.float32),
        grid=(B, N // TP),
        in_specs=[
            pl.BlockSpec((1, TP, Cin), lambda b, t: (b, t, 0)),
            pl.BlockSpec((Cin, HC), lambda b, t: (0, 0)),
            pl.BlockSpec((H, C, C), lambda b, t: (0, 0, 0)),
            pl.BlockSpec((H, C, C), lambda b, t: (0, 0, 0)),
        ],
        out_specs=pl.BlockSpec((1, H, TP, 3 * C), lambda b, t: (b, 0, t, 0)),
        compiler_params=pltpu.CompilerParams(
            dimension_semantics=("parallel", "parallel"),
            vmem_limit_bytes=48 * 1024 * 1024),
        cost_estimate=pl.CostEstimate(
            flops=2 * B * N * (Cin * HC + 2 * H * C * C),
            transcendentals=0,
            bytes_accessed=4 * B * N * (Cin + 4 * HC)),
    )(x, w1_all, w2a, w2b)

    cost2 = pl.CostEstimate(
        flops=(2 * B * H * N * N * (C + 1)            # distance rows
               + 2 * B * H * k * N * N * 2 * C        # one-hot gathers
               + 2 * B * H * N * C * HC),             # lane placement
        transcendentals=2 * B * H * k * N * C + B * N * HC,
        bytes_accessed=4 * (B * (N // TQ) * H * N * 3 * C
                            + B * H * N * 3 * C + B * N * HC),
    )

    out = pl.pallas_call(
        functools.partial(_gat_kernel, k=k),
        out_shape=jax.ShapeDtypeStruct((B, N, HC), jnp.float32),
        grid=(B, N // TQ, H),
        in_specs=[
            pl.BlockSpec((1, 1, N, 3 * C), lambda b, q, h: (b, h, 0, 0)),
            pl.BlockSpec((1, 1, TQ, 3 * C), lambda b, q, h: (b, h, q, 0)),
        ],
        out_specs=pl.BlockSpec((1, TQ, HC), lambda b, q, h: (b, q, 0)),
        compiler_params=pltpu.CompilerParams(
            dimension_semantics=("parallel", "parallel", "arbitrary"),
            vmem_limit_bytes=48 * 1024 * 1024),
        cost_estimate=cost2,
    )(yzc, yzc)
    return out


if __name__ == "__main__":
    # small deterministic example
    B, N, Cin = 2, 16, 4        # batch, num points, input channels
    cout, num_heads = 32, 4     # total output channels, heads
    C = cout // num_heads       # per-head channels
    k = 4                       # neighbors (self included)

    key = jax.random.PRNGKey(0)
    kx, kw1, kw2 = jax.random.split(key, 3)
    x = jax.random.normal(kx, (B, N, Cin), jnp.float32)
    w1 = jax.random.normal(kw1, (num_heads, Cin, C), jnp.float32) / math.sqrt(Cin)
    w2 = jax.random.normal(kw2, (num_heads, 2 * C, C), jnp.float32) / math.sqrt(2 * C)

    fwd = jax.jit(lambda a, b, c: multihead_graph_attention(a, b, c, k))
    out = fwd(x, w1, w2)
    jax.block_until_ready(out)
    assert out.shape == (B, N, cout) and out.dtype == jnp.float32
    assert bool(jnp.all(jnp.isfinite(out)))
    print("KERNEL_OK")
</pallas_src>

<mosaic_0001>
module attributes {stable_mosaic.version = 11 : i64} {
  func.func @_proj_kernel(%arg0: i32, %arg1: i32, %arg2: memref<1x16x4xf32, #tpu.memory_space<vmem>>, %arg3: memref<4x32xf32, #tpu.memory_space<vmem>>, %arg4: memref<4x8x8xf32, #tpu.memory_space<vmem>>, %arg5: memref<4x8x8xf32, #tpu.memory_space<vmem>>, %arg6: memref<1x4x16x24xf32, #tpu.memory_space<vmem>>) attributes {dimension_semantics = [#tpu.dimension_semantics<parallel>, #tpu.dimension_semantics<parallel>], iteration_bounds = array<i64: 2, 1>, scalar_prefetch = 0 : i64, scratch_operands = 0 : i64, tpu.core_type = #tpu.core_type<tc>, window_params = [{transform_indices = @transform_0, window_bounds = array<i64: 1, 16, 4>}, {pipeline_mode = #tpu.pipeline_mode<synchronous>, transform_indices = @transform_1, window_bounds = array<i64: 4, 32>}, {pipeline_mode = #tpu.pipeline_mode<synchronous>, transform_indices = @transform_2, window_bounds = array<i64: 4, 8, 8>}, {pipeline_mode = #tpu.pipeline_mode<synchronous>, transform_indices = @transform_3, window_bounds = array<i64: 4, 8, 8>}, {transform_indices = @transform_4, window_bounds = array<i64: 1, 4, 16, 24>}]} {
    %c0 = arith.constant 0 : index
    %c0_0 = arith.constant 0 : index
    %c0_1 = arith.constant 0 : index
    %0 = vector.load %arg2[%c0, %c0_0, %c0_1] : memref<1x16x4xf32, #tpu.memory_space<vmem>>, vector<1x16x4xf32>
    %1 = vector.shape_cast %0 : vector<1x16x4xf32> to vector<16x4xf32>
    %c0_2 = arith.constant 0 : index
    %c0_3 = arith.constant 0 : index
    %2 = vector.load %arg3[%c0_2, %c0_3] : memref<4x32xf32, #tpu.memory_space<vmem>>, vector<4x32xf32>
    %cst = arith.constant dense<0.000000e+00> : vector<16x32xf32>
    %3 = tpu.matmul %1, %2, %cst {dimension_numbers = #tpu.dot_dimension_numbers<[1], [0], [0], [1], [0, 0, 1, 1], [], []>} : vector<16x4xf32>, vector<4x32xf32>, vector<16x32xf32> -> vector<16x32xf32>
    %4 = vector.extract_strided_slice %3 {offsets = [0, 0], sizes = [16, 8], strides = [1, 1]} : vector<16x32xf32> to vector<16x8xf32>
    %c0_4 = arith.constant 0 : index
    %c0_5 = arith.constant 0 : index
    %c0_6 = arith.constant 0 : index
    %5 = vector.load %arg4[%c0_4, %c0_5, %c0_6] : memref<4x8x8xf32, #tpu.memory_space<vmem>>, vector<1x8x8xf32>
    %6 = vector.shape_cast %5 : vector<1x8x8xf32> to vector<8x8xf32>
    %cst_7 = arith.constant dense<0.000000e+00> : vector<16x8xf32>
    %7 = tpu.matmul %4, %6, %cst_7 {dimension_numbers = #tpu.dot_dimension_numbers<[1], [0], [0], [1], [0, 0, 1, 1], [], []>} : vector<16x8xf32>, vector<8x8xf32>, vector<16x8xf32> -> vector<16x8xf32>
    %c0_8 = arith.constant 0 : index
    %c0_9 = arith.constant 0 : index
    %c0_10 = arith.constant 0 : index
    %8 = vector.load %arg5[%c0_8, %c0_9, %c0_10] : memref<4x8x8xf32, #tpu.memory_space<vmem>>, vector<1x8x8xf32>
    %9 = vector.shape_cast %8 : vector<1x8x8xf32> to vector<8x8xf32>
    %cst_11 = arith.constant dense<0.000000e+00> : vector<16x8xf32>
    %10 = tpu.matmul %4, %9, %cst_11 {dimension_numbers = #tpu.dot_dimension_numbers<[1], [0], [0], [1], [0, 0, 1, 1], [], []>} : vector<16x8xf32>, vector<8x8xf32>, vector<16x8xf32> -> vector<16x8xf32>
    %11 = tpu.concatenate %4, %7, %10 in 1 : vector<16x8xf32>, vector<16x8xf32>, vector<16x8xf32> -> vector<16x24xf32>
    %c0_12 = arith.constant 0 : index
    %c0_13 = arith.constant 0 : index
    %c0_14 = arith.constant 0 : index
    %c0_15 = arith.constant 0 : index
    %12 = vector.load %arg6[%c0_12, %c0_13, %c0_14, %c0_15] : memref<1x4x16x24xf32, #tpu.memory_space<vmem>>, vector<1x1x16x24xf32>
    %13 = vector.shape_cast %12 : vector<1x1x16x24xf32> to vector<16x24xf32>
    %14 = vector.shape_cast %11 : vector<16x24xf32> to vector<1x1x16x24xf32>
    tpu.vector_store %arg6[%c0_12, %c0_13, %c0_14, %c0_15], %14 {strides = array<i32>} : memref<1x4x16x24xf32, #tpu.memory_space<vmem>>, vector<1x1x16x24xf32>,
    %15 = vector.extract_strided_slice %3 {offsets = [0, 8], sizes = [16, 8], strides = [1, 1]} : vector<16x32xf32> to vector<16x8xf32>
    %c1 = arith.constant 1 : index
    %c0_16 = arith.constant 0 : index
    %c0_17 = arith.constant 0 : index
    %16 = vector.load %arg4[%c1, %c0_16, %c0_17] : memref<4x8x8xf32, #tpu.memory_space<vmem>>, vector<1x8x8xf32>
    %17 = vector.shape_cast %16 : vector<1x8x8xf32> to vector<8x8xf32>
    %cst_18 = arith.constant dense<0.000000e+00> : vector<16x8xf32>
    %18 = tpu.matmul %15, %17, %cst_18 {dimension_numbers = #tpu.dot_dimension_numbers<[1], [0], [0], [1], [0, 0, 1, 1], [], []>} : vector<16x8xf32>, vector<8x8xf32>, vector<16x8xf32> -> vector<16x8xf32>
    %c1_19 = arith.constant 1 : index
    %c0_20 = arith.constant 0 : index
    %c0_21 = arith.constant 0 : index
    %19 = vector.load %arg5[%c1_19, %c0_20, %c0_21] : memref<4x8x8xf32, #tpu.memory_space<vmem>>, vector<1x8x8xf32>
    %20 = vector.shape_cast %19 : vector<1x8x8xf32> to vector<8x8xf32>
    %cst_22 = arith.constant dense<0.000000e+00> : vector<16x8xf32>
    %21 = tpu.matmul %15, %20, %cst_22 {dimension_numbers = #tpu.dot_dimension_numbers<[1], [0], [0], [1], [0, 0, 1, 1], [], []>} : vector<16x8xf32>, vector<8x8xf32>, vector<16x8xf32> -> vector<16x8xf32>
    %22 = tpu.concatenate %15, %18, %21 in 1 : vector<16x8xf32>, vector<16x8xf32>, vector<16x8xf32> -> vector<16x24xf32>
    %c0_23 = arith.constant 0 : index
    %c1_24 = arith.constant 1 : index
    %c0_25 = arith.constant 0 : index
    %c0_26 = arith.constant 0 : index
    %23 = vector.load %arg6[%c0_23, %c1_24, %c0_25, %c0_26] : memref<1x4x16x24xf32, #tpu.memory_space<vmem>>, vector<1x1x16x24xf32>
    %24 = vector.shape_cast %23 : vector<1x1x16x24xf32> to vector<16x24xf32>
    %25 = vector.shape_cast %22 : vector<16x24xf32> to vector<1x1x16x24xf32>
    tpu.vector_store %arg6[%c0_23, %c1_24, %c0_25, %c0_26], %25 {strides = array<i32>} : memref<1x4x16x24xf32, #tpu.memory_space<vmem>>, vector<1x1x16x24xf32>,
    %26 = vector.extract_strided_slice %3 {offsets = [0, 16], sizes = [16, 8], strides = [1, 1]} : vector<16x32xf32> to vector<16x8xf32>
    %c2 = arith.constant 2 : index
    %c0_27 = arith.constant 0 : index
    %c0_28 = arith.constant 0 : index
    %27 = vector.load %arg4[%c2, %c0_27, %c0_28] : memref<4x8x8xf32, #tpu.memory_space<vmem>>, vector<1x8x8xf32>
    %28 = vector.shape_cast %27 : vector<1x8x8xf32> to vector<8x8xf32>
    %cst_29 = arith.constant dense<0.000000e+00> : vector<16x8xf32>
    %29 = tpu.matmul %26, %28, %cst_29 {dimension_numbers = #tpu.dot_dimension_numbers<[1], [0], [0], [1], [0, 0, 1, 1], [], []>} : vector<16x8xf32>, vector<8x8xf32>, vector<16x8xf32> -> vector<16x8xf32>
    %c2_30 = arith.constant 2 : index
    %c0_31 = arith.constant 0 : index
    %c0_32 = arith.constant 0 : index
    %30 = vector.load %arg5[%c2_30, %c0_31, %c0_32] : memref<4x8x8xf32, #tpu.memory_space<vmem>>, vector<1x8x8xf32>
    %31 = vector.shape_cast %30 : vector<1x8x8xf32> to vector<8x8xf32>
    %cst_33 = arith.constant dense<0.000000e+00> : vector<16x8xf32>
    %32 = tpu.matmul %26, %31, %cst_33 {dimension_numbers = #tpu.dot_dimension_numbers<[1], [0], [0], [1], [0, 0, 1, 1], [], []>} : vector<16x8xf32>, vector<8x8xf32>, vector<16x8xf32> -> vector<16x8xf32>
    %33 = tpu.concatenate %26, %29, %32 in 1 : vector<16x8xf32>, vector<16x8xf32>, vector<16x8xf32> -> vector<16x24xf32>
    %c0_34 = arith.constant 0 : index
    %c2_35 = arith.constant 2 : index
    %c0_36 = arith.constant 0 : index
    %c0_37 = arith.constant 0 : index
    %34 = vector.load %arg6[%c0_34, %c2_35, %c0_36, %c0_37] : memref<1x4x16x24xf32, #tpu.memory_space<vmem>>, vector<1x1x16x24xf32>
    %35 = vector.shape_cast %34 : vector<1x1x16x24xf32> to vector<16x24xf32>
    %36 = vector.shape_cast %33 : vector<16x24xf32> to vector<1x1x16x24xf32>
    tpu.vector_store %arg6[%c0_34, %c2_35, %c0_36, %c0_37], %36 {strides = array<i32>} : memref<1x4x16x24xf32, #tpu.memory_space<vmem>>, vector<1x1x16x24xf32>,
    %37 = vector.extract_strided_slice %3 {offsets = [0, 24], sizes = [16, 8], strides = [1, 1]} : vector<16x32xf32> to vector<16x8xf32>
    %c3 = arith.constant 3 : index
    %c0_38 = arith.constant 0 : index
    %c0_39 = arith.constant 0 : index
    %38 = vector.load %arg4[%c3, %c0_38, %c0_39] : memref<4x8x8xf32, #tpu.memory_space<vmem>>, vector<1x8x8xf32>
    %39 = vector.shape_cast %38 : vector<1x8x8xf32> to vector<8x8xf32>
    %cst_40 = arith.constant dense<0.000000e+00> : vector<16x8xf32>
    %40 = tpu.matmul %37, %39, %cst_40 {dimension_numbers = #tpu.dot_dimension_numbers<[1], [0], [0], [1], [0, 0, 1, 1], [], []>} : vector<16x8xf32>, vector<8x8xf32>, vector<16x8xf32> -> vector<16x8xf32>
    %c3_41 = arith.constant 3 : index
    %c0_42 = arith.constant 0 : index
    %c0_43 = arith.constant 0 : index
    %41 = vector.load %arg5[%c3_41, %c0_42, %c0_43] : memref<4x8x8xf32, #tpu.memory_space<vmem>>, vector<1x8x8xf32>
    %42 = vector.shape_cast %41 : vector<1x8x8xf32> to vector<8x8xf32>
    %cst_44 = arith.constant dense<0.000000e+00> : vector<16x8xf32>
    %43 = tpu.matmul %37, %42, %cst_44 {dimension_numbers = #tpu.dot_dimension_numbers<[1], [0], [0], [1], [0, 0, 1, 1], [], []>} : vector<16x8xf32>, vector<8x8xf32>, vector<16x8xf32> -> vector<16x8xf32>
    %44 = tpu.concatenate %37, %40, %43 in 1 : vector<16x8xf32>, vector<16x8xf32>, vector<16x8xf32> -> vector<16x24xf32>
    %c0_45 = arith.constant 0 : index
    %c3_46 = arith.constant 3 : index
    %c0_47 = arith.constant 0 : index
    %c0_48 = arith.constant 0 : index
    %45 = vector.load %arg6[%c0_45, %c3_46, %c0_47, %c0_48] : memref<1x4x16x24xf32, #tpu.memory_space<vmem>>, vector<1x1x16x24xf32>
    %46 = vector.shape_cast %45 : vector<1x1x16x24xf32> to vector<16x24xf32>
    %47 = vector.shape_cast %44 : vector<16x24xf32> to vector<1x1x16x24xf32>
    tpu.vector_store %arg6[%c0_45, %c3_46, %c0_47, %c0_48], %47 {strides = array<i32>} : memref<1x4x16x24xf32, #tpu.memory_space<vmem>>, vector<1x1x16x24xf32>,
    return
  }
  func.func @transform_0(%arg0: i32, %arg1: i32) -> (i32, i32, i32) {
    %c0_i32 = arith.constant 0 : i32
    %c0_i32_0 = arith.constant 0 : i32
    return %arg0, %arg1, %c0_i32 : i32, i32, i32
  }
  func.func @transform_1(%arg0: i32, %arg1: i32) -> (i32, i32) {
    %c0_i32 = arith.constant 0 : i32
    %c0_i32_0 = arith.constant 0 : i32
    %c0_i32_1 = arith.constant 0 : i32
    return %c0_i32, %c0_i32_0 : i32, i32
  }
  func.func @transform_2(%arg0: i32, %arg1: i32) -> (i32, i32, i32) {
    %c0_i32 = arith.constant 0 : i32
    %c0_i32_0 = arith.constant 0 : i32
    %c0_i32_1 = arith.constant 0 : i32
    %c0_i32_2 = arith.constant 0 : i32
    return %c0_i32, %c0_i32_0, %c0_i32_1 : i32, i32, i32
  }
  func.func @transform_3(%arg0: i32, %arg1: i32) -> (i32, i32, i32) {
    %c0_i32 = arith.constant 0 : i32
    %c0_i32_0 = arith.constant 0 : i32
    %c0_i32_1 = arith.constant 0 : i32
    %c0_i32_2 = arith.constant 0 : i32
    return %c0_i32, %c0_i32_0, %c0_i32_1 : i32, i32, i32
  }
  func.func @transform_4(%arg0: i32, %arg1: i32) -> (i32, i32, i32, i32) {
    %c0_i32 = arith.constant 0 : i32
    %c0_i32_0 = arith.constant 0 : i32
    %c0_i32_1 = arith.constant 0 : i32
    return %arg0, %c0_i32, %arg1, %c0_i32_0 : i32, i32, i32, i32
  }
}

module attributes {stable_mosaic.version = 11 : i64} {
  func.func @_gat_kernel(%arg0: i32, %arg1: i32, %arg2: i32, %arg3: memref<1x1x16x24xf32, #tpu.memory_space<vmem>>, %arg4: memref<1x1x16x24xf32, #tpu.memory_space<vmem>>, %arg5: memref<1x16x32xf32, #tpu.memory_space<vmem>>) attributes {dimension_semantics = [#tpu.dimension_semantics<parallel>, #tpu.dimension_semantics<parallel>, #tpu.dimension_semantics<arbitrary>], iteration_bounds = array<i64: 2, 1, 4>, scalar_prefetch = 0 : i64, scratch_operands = 0 : i64, tpu.core_type = #tpu.core_type<tc>, window_params = [{transform_indices = @transform_0, window_bounds = array<i64: 1, 1, 16, 24>}, {transform_indices = @transform_1, window_bounds = array<i64: 1, 1, 16, 24>}, {transform_indices = @transform_2, window_bounds = array<i64: 1, 16, 32>}]} {
    %c0_i32 = arith.constant 0 : i32
    %0 = arith.cmpi eq, %arg2, %c0_i32 : i32
    %1 = arith.extui %0 : i1 to i32
    %c0_i32_0 = arith.constant 0 : i32
    %2 = arith.cmpi ne, %1, %c0_i32_0 : i32
    scf.if %2 {
      %cst_54 = arith.constant 0.000000e+00 : f32
      %194 = vector.broadcast %cst_54 : f32 to vector<1x16x32xf32>
      %c0_55 = arith.constant 0 : index
      %c0_56 = arith.constant 0 : index
      %c0_57 = arith.constant 0 : index
      %195 = vector.load %arg5[%c0_55, %c0_56, %c0_57] : memref<1x16x32xf32, #tpu.memory_space<vmem>>, vector<1x16x32xf32>
      tpu.vector_store %arg5[%c0_55, %c0_56, %c0_57], %194 {strides = array<i32>} : memref<1x16x32xf32, #tpu.memory_space<vmem>>, vector<1x16x32xf32>,
    } else {
    }
    %c0 = arith.constant 0 : index
    %c0_1 = arith.constant 0 : index
    %c0_2 = arith.constant 0 : index
    %c0_3 = arith.constant 0 : index
    %3 = vector.load %arg3[%c0, %c0_1, %c0_2, %c0_3] : memref<1x1x16x24xf32, #tpu.memory_space<vmem>>, vector<1x1x16x24xf32>
    %4 = vector.shape_cast %3 : vector<1x1x16x24xf32> to vector<16x24xf32>
    %c0_4 = arith.constant 0 : index
    %c0_5 = arith.constant 0 : index
    %c0_6 = arith.constant 0 : index
    %c0_7 = arith.constant 0 : index
    %5 = vector.load %arg4[%c0_4, %c0_5, %c0_6, %c0_7] : memref<1x1x16x24xf32, #tpu.memory_space<vmem>>, vector<1x1x16x24xf32>
    %6 = vector.shape_cast %5 : vector<1x1x16x24xf32> to vector<16x24xf32>
    %7 = vector.extract_strided_slice %4 {offsets = [0, 0], sizes = [16, 8], strides = [1, 1]} : vector<16x24xf32> to vector<16x8xf32>
    %8 = vector.extract_strided_slice %4 {offsets = [0, 0], sizes = [16, 16], strides = [1, 1]} : vector<16x24xf32> to vector<16x16xf32>
    %9 = arith.truncf %8 : vector<16x16xf32> to vector<16x16xbf16>
    %10 = vector.extract_strided_slice %6 {offsets = [0, 0], sizes = [16, 8], strides = [1, 1]} : vector<16x24xf32> to vector<16x8xf32>
    %11 = vector.extract_strided_slice %6 {offsets = [0, 16], sizes = [16, 8], strides = [1, 1]} : vector<16x24xf32> to vector<16x8xf32>
    %12 = arith.mulf %7, %7 : vector<16x8xf32>
    %cst = arith.constant dense<0.000000e+00> : vector<16xf32>
    %13 = vector.multi_reduction <add>, %12, %cst [1] : vector<16x8xf32> to vector<16xf32>
    %14 = vector.shape_cast %13 : vector<16xf32> to vector<16x1xf32>
    %cst_8 = arith.constant -2.000000e+00 : f32
    %15 = vector.broadcast %cst_8 : f32 to vector<16x8xf32>
    %16 = arith.mulf %10, %15 : vector<16x8xf32>
    %cst_9 = arith.constant 1.000000e+00 : f32
    %17 = vector.broadcast %cst_9 : f32 to vector<16x1xf32>
    %18 = tpu.concatenate %16, %17 in 1 : vector<16x8xf32>, vector<16x1xf32> -> vector<16x9xf32>
    %19 = tpu.concatenate %7, %14 in 1 : vector<16x8xf32>, vector<16x1xf32> -> vector<16x9xf32>
    "tpu.trace_start"() <{level = 10 : i32, message = "qc,nc->qn"}> : () -> ()
    %cst_10 = arith.constant dense<0.000000e+00> : vector<16x16xf32>
    %20 = tpu.matmul %18, %19, %cst_10 {dimension_numbers = #tpu.dot_dimension_numbers<[1], [1], [0], [0], [0, 0, 1, 0], [], []>} : vector<16x9xf32>, vector<16x9xf32>, vector<16x16xf32> -> vector<16x16xf32>
    "tpu.trace_stop"() : () -> ()
    %21 = tpu.iota {dimensions = array<i32: 1>} : vector<16x16xi32>
    %22 = arith.sitofp %21 : vector<16x16xi32> to vector<16x16xf32>
    %23 = tpu.iota {dimensions = array<i32: 0>} : vector<16x16xi32>
    %c16_i32 = arith.constant 16 : i32
    %24 = arith.muli %arg1, %c16_i32 : i32
    %25 = vector.broadcast %24 : i32 to vector<16x16xi32>
    %26 = arith.addi %23, %25 : vector<16x16xi32>
    %27 = arith.sitofp %26 : vector<16x16xi32> to vector<16x16xf32>
    %28 = arith.cmpf oeq, %22, %27 : vector<16x16xf32>
    %cst_11 = arith.constant -1.000000e+30 : f32
    %29 = vector.broadcast %cst_11 : f32 to vector<16x16xf32>
    %30 = arith.select %28, %29, %20 : vector<16x16xi1>, vector<16x16xf32>
    %cst_12 = arith.constant -1.000000e+30 : f32
    %31 = vector.broadcast %cst_12 : f32 to vector<16x8xf32>
    %cst_13 = arith.constant 0.000000e+00 : f32
    %32 = vector.broadcast %cst_13 : f32 to vector<16x8xf32>
    %cst_14 = arith.constant 0.000000e+00 : f32
    %33 = vector.broadcast %cst_14 : f32 to vector<16x8xf32>
    %c0_i32_15 = arith.constant 0 : i32
    %cst_16 = arith.constant dense<0x7F800000> : vector<16xf32>
    %34 = vector.multi_reduction <minimumf>, %30, %cst_16 [1] : vector<16x16xf32> to vector<16xf32>
    %35 = vector.shape_cast %34 : vector<16xf32> to vector<16x1xf32>
    %36 = vector.broadcast %35 : vector<16x1xf32> to vector<16x16xf32>
    %37 = arith.cmpf ole, %30, %36 : vector<16x16xf32>
    %cst_17 = arith.constant 1.600000e+01 : f32
    %38 = vector.broadcast %cst_17 : f32 to vector<16x16xf32>
    %39 = arith.select %37, %22, %38 : vector<16x16xi1>, vector<16x16xf32>
    %cst_18 = arith.constant dense<0x7F800000> : vector<16xf32>
    %40 = vector.multi_reduction <minimumf>, %39, %cst_18 [1] : vector<16x16xf32> to vector<16xf32>
    %41 = vector.shape_cast %40 : vector<16xf32> to vector<16x1xf32>
    %42 = vector.broadcast %41 : vector<16x1xf32> to vector<16x16xf32>
    %43 = arith.cmpf oeq, %22, %42 : vector<16x16xf32>
    %cst_19 = arith.constant 1.000000e+30 : f32
    %44 = vector.broadcast %cst_19 : f32 to vector<16x16xf32>
    %45 = arith.select %43, %44, %30 : vector<16x16xi1>, vector<16x16xf32>
    %46 = arith.extui %43 : vector<16x16xi1> to vector<16x16xi32>
    %47 = arith.sitofp %46 : vector<16x16xi32> to vector<16x16xf32>
    %48 = arith.truncf %47 : vector<16x16xf32> to vector<16x16xbf16>
    %cst_20 = arith.constant dense<0.000000e+00> : vector<16x16xf32>
    %49 = tpu.matmul %48, %9, %cst_20 {dimension_numbers = #tpu.dot_dimension_numbers<[1], [0], [0], [1], [0, 0, 1, 1], [], []>} : vector<16x16xbf16>, vector<16x16xbf16>, vector<16x16xf32> -> vector<16x16xf32>
    %50 = vector.extract_strided_slice %49 {offsets = [0, 0], sizes = [16, 8], strides = [1, 1]} : vector<16x16xf32> to vector<16x8xf32>
    %51 = vector.extract_strided_slice %49 {offsets = [0, 8], sizes = [16, 8], strides = [1, 1]} : vector<16x16xf32> to vector<16x8xf32>
    %52 = arith.addf %51, %11 : vector<16x8xf32>
    %cst_21 = arith.constant 0.000000e+00 : f32
    %53 = vector.broadcast %cst_21 : f32 to vector<16x8xf32>
    %54 = arith.cmpf ogt, %52, %53 : vector<16x8xf32>
    %cst_22 = arith.constant 2.000000e-01 : f32
    %55 = vector.broadcast %cst_22 : f32 to vector<16x8xf32>
    %56 = arith.mulf %55, %52 : vector<16x8xf32>
    %57 = arith.select %54, %52, %56 : vector<16x8xi1>, vector<16x8xf32>
    %58 = arith.maximumf %31, %57 : vector<16x8xf32>
    %59 = arith.subf %31, %58 : vector<16x8xf32>
    %60 = math.exp %59 : vector<16x8xf32>
    %61 = arith.subf %57, %58 : vector<16x8xf32>
    %62 = math.exp %61 : vector<16x8xf32>
    %63 = arith.mulf %60, %32 : vector<16x8xf32>
    %64 = arith.addf %63, %62 : vector<16x8xf32>
    %65 = arith.mulf %60, %33 : vector<16x8xf32>
    %66 = arith.mulf %62, %50 : vector<16x8xf32>
    %67 = arith.addf %65, %66 : vector<16x8xf32>
    %c1_i32 = arith.constant 1 : i32
    %cst_23 = arith.constant dense<0x7F800000> : vector<16xf32>
    %68 = vector.multi_reduction <minimumf>, %45, %cst_23 [1] : vector<16x16xf32> to vector<16xf32>
    %69 = vector.shape_cast %68 : vector<16xf32> to vector<16x1xf32>
    %70 = vector.broadcast %69 : vector<16x1xf32> to vector<16x16xf32>
    %71 = arith.cmpf ole, %45, %70 : vector<16x16xf32>
    %cst_24 = arith.constant 1.600000e+01 : f32
    %72 = vector.broadcast %cst_24 : f32 to vector<16x16xf32>
    %73 = arith.select %71, %22, %72 : vector<16x16xi1>, vector<16x16xf32>
    %cst_25 = arith.constant dense<0x7F800000> : vector<16xf32>
    %74 = vector.multi_reduction <minimumf>, %73, %cst_25 [1] : vector<16x16xf32> to vector<16xf32>
    %75 = vector.shape_cast %74 : vector<16xf32> to vector<16x1xf32>
    %76 = vector.broadcast %75 : vector<16x1xf32> to vector<16x16xf32>
    %77 = arith.cmpf oeq, %22, %76 : vector<16x16xf32>
    %cst_26 = arith.constant 1.000000e+30 : f32
    %78 = vector.broadcast %cst_26 : f32 to vector<16x16xf32>
    %79 = arith.select %77, %78, %45 : vector<16x16xi1>, vector<16x16xf32>
    %80 = arith.extui %77 : vector<16x16xi1> to vector<16x16xi32>
    %81 = arith.sitofp %80 : vector<16x16xi32> to vector<16x16xf32>
    %82 = arith.truncf %81 : vector<16x16xf32> to vector<16x16xbf16>
    %cst_27 = arith.constant dense<0.000000e+00> : vector<16x16xf32>
    %83 = tpu.matmul %82, %9, %cst_27 {dimension_numbers = #tpu.dot_dimension_numbers<[1], [0], [0], [1], [0, 0, 1, 1], [], []>} : vector<16x16xbf16>, vector<16x16xbf16>, vector<16x16xf32> -> vector<16x16xf32>
    %84 = vector.extract_strided_slice %83 {offsets = [0, 0], sizes = [16, 8], strides = [1, 1]} : vector<16x16xf32> to vector<16x8xf32>
    %85 = vector.extract_strided_slice %83 {offsets = [0, 8], sizes = [16, 8], strides = [1, 1]} : vector<16x16xf32> to vector<16x8xf32>
    %86 = arith.addf %85, %11 : vector<16x8xf32>
    %cst_28 = arith.constant 0.000000e+00 : f32
    %87 = vector.broadcast %cst_28 : f32 to vector<16x8xf32>
    %88 = arith.cmpf ogt, %86, %87 : vector<16x8xf32>
    %cst_29 = arith.constant 2.000000e-01 : f32
    %89 = vector.broadcast %cst_29 : f32 to vector<16x8xf32>
    %90 = arith.mulf %89, %86 : vector<16x8xf32>
    %91 = arith.select %88, %86, %90 : vector<16x8xi1>, vector<16x8xf32>
    %92 = arith.maximumf %58, %91 : vector<16x8xf32>
    %93 = arith.subf %58, %92 : vector<16x8xf32>
    %94 = math.exp %93 : vector<16x8xf32>
    %95 = arith.subf %91, %92 : vector<16x8xf32>
    %96 = math.exp %95 : vector<16x8xf32>
    %97 = arith.mulf %94, %64 : vector<16x8xf32>
    %98 = arith.addf %97, %96 : vector<16x8xf32>
    %99 = arith.mulf %94, %67 : vector<16x8xf32>
    %100 = arith.mulf %96, %84 : vector<16x8xf32>
    %101 = arith.addf %99, %100 : vector<16x8xf32>
    %c2_i32 = arith.constant 2 : i32
    %cst_30 = arith.constant dense<0x7F800000> : vector<16xf32>
    %102 = vector.multi_reduction <minimumf>, %79, %cst_30 [1] : vector<16x16xf32> to vector<16xf32>
    %103 = vector.shape_cast %102 : vector<16xf32> to vector<16x1xf32>
    %104 = vector.broadcast %103 : vector<16x1xf32> to vector<16x16xf32>
    %105 = arith.cmpf ole, %79, %104 : vector<16x16xf32>
    %cst_31 = arith.constant 1.600000e+01 : f32
    %106 = vector.broadcast %cst_31 : f32 to vector<16x16xf32>
    %107 = arith.select %105, %22, %106 : vector<16x16xi1>, vector<16x16xf32>
    %cst_32 = arith.constant dense<0x7F800000> : vector<16xf32>
    %108 = vector.multi_reduction <minimumf>, %107, %cst_32 [1] : vector<16x16xf32> to vector<16xf32>
    %109 = vector.shape_cast %108 : vector<16xf32> to vector<16x1xf32>
    %110 = vector.broadcast %109 : vector<16x1xf32> to vector<16x16xf32>
    %111 = arith.cmpf oeq, %22, %110 : vector<16x16xf32>
    %cst_33 = arith.constant 1.000000e+30 : f32
    %112 = vector.broadcast %cst_33 : f32 to vector<16x16xf32>
    %113 = arith.select %111, %112, %79 : vector<16x16xi1>, vector<16x16xf32>
    %114 = arith.extui %111 : vector<16x16xi1> to vector<16x16xi32>
    %115 = arith.sitofp %114 : vector<16x16xi32> to vector<16x16xf32>
    %116 = arith.truncf %115 : vector<16x16xf32> to vector<16x16xbf16>
    %cst_34 = arith.constant dense<0.000000e+00> : vector<16x16xf32>
    %117 = tpu.matmul %116, %9, %cst_34 {dimension_numbers = #tpu.dot_dimension_numbers<[1], [0], [0], [1], [0, 0, 1, 1], [], []>} : vector<16x16xbf16>, vector<16x16xbf16>, vector<16x16xf32> -> vector<16x16xf32>
    %118 = vector.extract_strided_slice %117 {offsets = [0, 0], sizes = [16, 8], strides = [1, 1]} : vector<16x16xf32> to vector<16x8xf32>
    %119 = vector.extract_strided_slice %117 {offsets = [0, 8], sizes = [16, 8], strides = [1, 1]} : vector<16x16xf32> to vector<16x8xf32>
    %120 = arith.addf %119, %11 : vector<16x8xf32>
    %cst_35 = arith.constant 0.000000e+00 : f32
    %121 = vector.broadcast %cst_35 : f32 to vector<16x8xf32>
    %122 = arith.cmpf ogt, %120, %121 : vector<16x8xf32>
    %cst_36 = arith.constant 2.000000e-01 : f32
    %123 = vector.broadcast %cst_36 : f32 to vector<16x8xf32>
    %124 = arith.mulf %123, %120 : vector<16x8xf32>
    %125 = arith.select %122, %120, %124 : vector<16x8xi1>, vector<16x8xf32>
    %126 = arith.maximumf %92, %125 : vector<16x8xf32>
    %127 = arith.subf %92, %126 : vector<16x8xf32>
    %128 = math.exp %127 : vector<16x8xf32>
    %129 = arith.subf %125, %126 : vector<16x8xf32>
    %130 = math.exp %129 : vector<16x8xf32>
    %131 = arith.mulf %128, %98 : vector<16x8xf32>
    %132 = arith.addf %131, %130 : vector<16x8xf32>
    %133 = arith.mulf %128, %101 : vector<16x8xf32>
    %134 = arith.mulf %130, %118 : vector<16x8xf32>
    %135 = arith.addf %133, %134 : vector<16x8xf32>
    %c3_i32 = arith.constant 3 : i32
    %cst_37 = arith.constant dense<0x7F800000> : vector<16xf32>
    %136 = vector.multi_reduction <minimumf>, %113, %cst_37 [1] : vector<16x16xf32> to vector<16xf32>
    %137 = vector.shape_cast %136 : vector<16xf32> to vector<16x1xf32>
    %138 = vector.broadcast %137 : vector<16x1xf32> to vector<16x16xf32>
    %139 = arith.cmpf ole, %113, %138 : vector<16x16xf32>
    %cst_38 = arith.constant 1.600000e+01 : f32
    %140 = vector.broadcast %cst_38 : f32 to vector<16x16xf32>
    %141 = arith.select %139, %22, %140 : vector<16x16xi1>, vector<16x16xf32>
    %cst_39 = arith.constant dense<0x7F800000> : vector<16xf32>
    %142 = vector.multi_reduction <minimumf>, %141, %cst_39 [1] : vector<16x16xf32> to vector<16xf32>
    %143 = vector.shape_cast %142 : vector<16xf32> to vector<16x1xf32>
    %144 = vector.broadcast %143 : vector<16x1xf32> to vector<16x16xf32>
    %145 = arith.cmpf oeq, %22, %144 : vector<16x16xf32>
    %cst_40 = arith.constant 1.000000e+30 : f32
    %146 = vector.broadcast %cst_40 : f32 to vector<16x16xf32>
    %147 = arith.select %145, %146, %113 : vector<16x16xi1>, vector<16x16xf32>
    %148 = arith.extui %145 : vector<16x16xi1> to vector<16x16xi32>
    %149 = arith.sitofp %148 : vector<16x16xi32> to vector<16x16xf32>
    %150 = arith.truncf %149 : vector<16x16xf32> to vector<16x16xbf16>
    %cst_41 = arith.constant dense<0.000000e+00> : vector<16x16xf32>
    %151 = tpu.matmul %150, %9, %cst_41 {dimension_numbers = #tpu.dot_dimension_numbers<[1], [0], [0], [1], [0, 0, 1, 1], [], []>} : vector<16x16xbf16>, vector<16x16xbf16>, vector<16x16xf32> -> vector<16x16xf32>
    %152 = vector.extract_strided_slice %151 {offsets = [0, 0], sizes = [16, 8], strides = [1, 1]} : vector<16x16xf32> to vector<16x8xf32>
    %153 = vector.extract_strided_slice %151 {offsets = [0, 8], sizes = [16, 8], strides = [1, 1]} : vector<16x16xf32> to vector<16x8xf32>
    %154 = arith.addf %153, %11 : vector<16x8xf32>
    %cst_42 = arith.constant 0.000000e+00 : f32
    %155 = vector.broadcast %cst_42 : f32 to vector<16x8xf32>
    %156 = arith.cmpf ogt, %154, %155 : vector<16x8xf32>
    %cst_43 = arith.constant 2.000000e-01 : f32
    %157 = vector.broadcast %cst_43 : f32 to vector<16x8xf32>
    %158 = arith.mulf %157, %154 : vector<16x8xf32>
    %159 = arith.select %156, %154, %158 : vector<16x8xi1>, vector<16x8xf32>
    %160 = arith.maximumf %126, %159 : vector<16x8xf32>
    %161 = arith.subf %126, %160 : vector<16x8xf32>
    %162 = math.exp %161 : vector<16x8xf32>
    %163 = arith.subf %159, %160 : vector<16x8xf32>
    %164 = math.exp %163 : vector<16x8xf32>
    %165 = arith.mulf %162, %132 : vector<16x8xf32>
    %166 = arith.addf %165, %164 : vector<16x8xf32>
    %167 = arith.mulf %162, %135 : vector<16x8xf32>
    %168 = arith.mulf %164, %152 : vector<16x8xf32>
    %169 = arith.addf %167, %168 : vector<16x8xf32>
    %170 = arith.divf %169, %166 : vector<16x8xf32>
    %cst_44 = arith.constant 0.000000e+00 : f32
    %171 = vector.broadcast %cst_44 : f32 to vector<16x8xf32>
    %172 = arith.cmpf ogt, %170, %171 : vector<16x8xf32>
    %cst_45 = arith.constant 0.000000e+00 : f32
    %173 = vector.broadcast %cst_45 : f32 to vector<16x8xf32>
    %174 = arith.minimumf %170, %173 : vector<16x8xf32>
    %175 = math.exp %174 : vector<16x8xf32>
    %cst_46 = arith.constant 1.000000e+00 : f32
    %176 = vector.broadcast %cst_46 : f32 to vector<16x8xf32>
    %177 = arith.subf %175, %176 : vector<16x8xf32>
    %178 = arith.select %172, %170, %177 : vector<16x8xi1>, vector<16x8xf32>
    %179 = tpu.iota {dimensions = array<i32: 0>} : vector<8x32xi32>
    %180 = tpu.iota {dimensions = array<i32: 1>} : vector<8x32xi32>
    %c8_i32 = arith.constant 8 : i32
    %181 = arith.muli %arg2, %c8_i32 : i32
    %182 = vector.broadcast %181 : i32 to vector<8x32xi32>
    %183 = arith.addi %179, %182 : vector<8x32xi32>
    %184 = arith.cmpi eq, %180, %183 : vector<8x32xi32>
    %185 = arith.extui %184 : vector<8x32xi1> to vector<8x32xi32>
    %186 = arith.sitofp %185 : vector<8x32xi32> to vector<8x32xf32>
    %c0_47 = arith.constant 0 : index
    %c0_48 = arith.constant 0 : index
    %c0_49 = arith.constant 0 : index
    %187 = vector.load %arg5[%c0_47, %c0_48, %c0_49] : memref<1x16x32xf32, #tpu.memory_space<vmem>>, vector<1x16x32xf32>
    %188 = vector.shape_cast %187 : vector<1x16x32xf32> to vector<16x32xf32>
    %cst_50 = arith.constant dense<0.000000e+00> : vector<16x32xf32>
    %189 = tpu.matmul %178, %186, %cst_50 {dimension_numbers = #tpu.dot_dimension_numbers<[1], [0], [0], [1], [0, 0, 1, 1], [], []>} : vector<16x8xf32>, vector<8x32xf32>, vector<16x32xf32> -> vector<16x32xf32>
    %190 = arith.addf %188, %189 : vector<16x32xf32>
    %c0_51 = arith.constant 0 : index
    %c0_52 = arith.constant 0 : index
    %c0_53 = arith.constant 0 : index
    %191 = vector.load %arg5[%c0_51, %c0_52, %c0_53] : memref<1x16x32xf32, #tpu.memory_space<vmem>>, vector<1x16x32xf32>
    %192 = vector.shape_cast %191 : vector<1x16x32xf32> to vector<16x32xf32>
    %193 = vector.shape_cast %190 : vector<16x32xf32> to vector<1x16x32xf32>
    tpu.vector_store %arg5[%c0_51, %c0_52, %c0_53], %193 {strides = array<i32>} : memref<1x16x32xf32, #tpu.memory_space<vmem>>, vector<1x16x32xf32>,
    return
  }
  func.func @transform_0(%arg0: i32, %arg1: i32, %arg2: i32) -> (i32, i32, i32, i32) {
    %c0_i32 = arith.constant 0 : i32
    %c0_i32_0 = arith.constant 0 : i32
    %c0_i32_1 = arith.constant 0 : i32
    return %arg0, %arg2, %c0_i32, %c0_i32_0 : i32, i32, i32, i32
  }
  func.func @transform_1(%arg0: i32, %arg1: i32, %arg2: i32) -> (i32, i32, i32, i32) {
    %c0_i32 = arith.constant 0 : i32
    %c0_i32_0 = arith.constant 0 : i32
    return %arg0, %arg2, %arg1, %c0_i32 : i32, i32, i32, i32
  }
  func.func @transform_2(%arg0: i32, %arg1: i32, %arg2: i32) -> (i32, i32, i32) {
    %c0_i32 = arith.constant 0 : i32
    %c0_i32_0 = arith.constant 0 : i32
    return %arg0, %arg1, %c0_i32 : i32, i32, i32
  }
}

</mosaic_0001>

<llo_original>
// kernel: _lambda_.3
$region0: #{_lambda_.3}
  #allocation0 [shape = 'u32[]', space=smem, size = 0x4, offset = 0x4, fixed_abs, tag = 'smem constant byte address 0x4 - core index']
  #allocation1 [shape = 'u32[144,128]{1,0:T(1,128)}', space=vmem, size = 0x12000, scoped, tag = 'internal scratch']
  %s0 = inlined_call_operand.vmem [shape: f32[2,4,16,24], index: 0, kind: input, shape index: {}, may-alias: {0,1}]
  %s1 = inlined_call_operand.vmem [shape: f32[2,4,16,24], index: 1, kind: input, shape index: {}, may-alias: {0,1}]
  %s2 = inlined_call_operand.hbm [shape: f32[2,16,32], index: 2, kind: output, shape index: {}]
  %s3 = sld [smem:[#allocation0]]
  $region45: #{_lambda_.3} parent=0
    _
  %s5 = ssub.s32 1, %s3
  %s6 = scalar_select 0, %s5, %s3
  $region1: #{_lambda_.3} parent=0
    #allocation2 [shape = 'u8[16384]{0}', space=vmem, size = 0x4000, scoped, tag = 'output window, operand 0']
    #allocation3 [shape = 's32[2]{0}', space=sflag, size = 0x8, scoped, tag = 'scoped memory for _lambda_.3']
    %7 = vsyncpa [#allocation3], 0
    %s8 = scalar_lea.sflag [#allocation3], 1
    %9 = vsyncpa %s8, 0
    loop: start=0, step=1, limit=10
    $region2: #{_lambda_.3} parent=1 // loop_pre_header
      _
    $region3: #{_lambda_.3} parent=1 // loop_header
      %s11 = sphi 0, %s15
      %p12 = scmp.ge.s32.totalorder %s11, 10
      %s18 = sphi 0, %s37
      %s19 = sphi 0, %s33
      %s20 = sphi 0, %s29
      %s21 = sphi 0, %s18
      %s22 = sphi 0, %s19
      %s23 = sphi 0, %s20
      %s24 = sphi 0, %s21
      %s25 = sphi 0, %s22
      %s26 = sphi 0, %s23
      %s42 = sphi 0, %s44
      %s45 = sphi 0, %s42
      %s46 = sphi 0, %s45
      %s62 = sphi 0, %s46
      %s72 = sphi 0, %s74
      %s75 = sphi 0, %s72
      %s76 = sphi 0, %s75
      %s92 = sphi 0, %s76
      %s100 = sphi 0, %s102
      %s103 = sphi 0, %s100
      %s104 = sphi 0, %s103
      %s120 = sphi 0, %s104
    $region4: #{_lambda_.3} parent=1 // loop_header_branch
      %14 = sbr.rel (%p12) target = $region8
    $region5: #{_lambda_.3} parent=1 // loop_body
      %s16 = ssub.s32 %s11, 1
      %s17 = ssub.s32 %s11, 2
      %s27 = sadd.s32 1, %s20
      %p28 = scmp.ge.s32.totalorder %s27, 4
      %s29 = scalar_select %p28, 0, %s27
      %s30 = sadd.s32 1, %s19
      %s31 = scalar_select %p28, %s30, %s19
      %p32 = scmp.ge.s32.totalorder %s31, 1
      %s33 = scalar_select %p32, 0, %s31
      %s34 = sadd.s32 1, %s18
      %s35 = scalar_select %p32, %s34, %s18
      %p36 = scmp.ge.s32.totalorder %s35, 2
      %s37 = scalar_select %p36, 0, %s35
      %s38 = ssub.s32 %s18, %s37
      %s39 = ssub.s32 %s20, %s29
      %s40 = sor.u32 %s38, %s39
      %p41 = scmp.eq.s32.totalorder %s40, 0
      %s43 = sadd.s32 %s42, 1
      %s44 = scalar_select %p41, %s42, %s43
      %p47 = pneg %p41
      %p48 = scmp.eq.s32.totalorder %s11, 7
      %p49 = por %p47, %p48
      %p50 = scmp.ne.s32.totalorder %s42, %s45
      %p51 = scmp.eq.s32.totalorder %s11, 0
      %p52 = por %p50, %p51
      %p53 = scmp.ne.s32.totalorder %s42, %s45
      %p54 = scmp.eq.s32.totalorder %s16, 7
      %p55 = por %p53, %p54
      %p56 = scmp.ne.s32.totalorder %s45, %s46
      %p57 = scmp.eq.s32.totalorder %s16, 0
      %p58 = por %p56, %p57
      %p59 = scmp.ne.s32.totalorder %s45, %s46
      %p60 = scmp.eq.s32.totalorder %s17, 7
      %p61 = por %p59, %p60
      %p63 = scmp.ne.s32.totalorder %s46, %s62
      %p64 = scmp.eq.s32.totalorder %s17, 0
      %p65 = por %p63, %p64
      %s66 = ssub.s32 %s18, %s37
      %s67 = ssub.s32 %s20, %s29
      %s68 = sor.u32 %s66, %s67
      %s69 = ssub.s32 %s19, %s33
      %s70 = sor.u32 %s68, %s69
      %p71 = scmp.eq.s32.totalorder %s70, 0
      %s73 = sadd.s32 %s72, 1
      %s74 = scalar_select %p71, %s72, %s73
      %p77 = pneg %p71
      %p78 = scmp.eq.s32.totalorder %s11, 7
      %p79 = por %p77, %p78
      %p80 = scmp.ne.s32.totalorder %s72, %s75
      %p81 = scmp.eq.s32.totalorder %s11, 0
      %p82 = por %p80, %p81
      %p83 = scmp.ne.s32.totalorder %s72, %s75
      %p84 = scmp.eq.s32.totalorder %s16, 7
      %p85 = por %p83, %p84
      %p86 = scmp.ne.s32.totalorder %s75, %s76
      %p87 = scmp.eq.s32.totalorder %s16, 0
      %p88 = por %p86, %p87
      %p89 = scmp.ne.s32.totalorder %s75, %s76
      %p90 = scmp.eq.s32.totalorder %s17, 7
      %p91 = por %p89, %p90
      %p93 = scmp.ne.s32.totalorder %s76, %s92
      %p94 = scmp.eq.s32.totalorder %s17, 0
      %p95 = por %p93, %p94
      %s96 = ssub.s32 %s18, %s37
      %s97 = ssub.s32 %s19, %s33
      %s98 = sor.u32 %s96, %s97
      %p99 = scmp.eq.s32.totalorder %s98, 0
      %s101 = sadd.s32 %s100, 1
      %s102 = scalar_select %p99, %s100, %s101
      %p105 = pneg %p99
      %p106 = scmp.eq.s32.totalorder %s11, 7
      %p107 = por %p105, %p106
      %p108 = scmp.ne.s32.totalorder %s100, %s103
      %p109 = scmp.eq.s32.totalorder %s11, 0
      %p110 = por %p108, %p109
      %p111 = scmp.ne.s32.totalorder %s100, %s103
      %p112 = scmp.eq.s32.totalorder %s16, 7
      %p113 = por %p111, %p112
      %p114 = scmp.ne.s32.totalorder %s103, %s104
      %p115 = scmp.eq.s32.totalorder %s16, 0
      %p116 = por %p114, %p115
      %p117 = scmp.ne.s32.totalorder %s103, %s104
      %p118 = scmp.eq.s32.totalorder %s17, 7
      %p119 = por %p117, %p118
      %p121 = scmp.ne.s32.totalorder %s104, %s120
      %p122 = scmp.eq.s32.totalorder %s17, 0
      %p123 = por %p121, %p122
      %p124 = scmp.le.s32.totalorder 1, %s11
      %p125 = scmp.lt.s32.totalorder %s11, 9
      %p126 = pnand %p124, %p125
      %p127 = pneg %p126
      // Predicated region
      $region9: #{_lambda_.3} parent=5 // pred_check
        _
      $region10: #{_lambda_.3} parent=5 // pred_check_branch
        %129 = sbr.rel (%p126) target = $region12
      $region11: #{_lambda_.3} parent=5 // pred_region
        %s130 = ssub.s32 %s11, 1
      $region12: #{_lambda_.3} parent=5 // pred_fallthru
        _
      %p131 = scmp.lt.s32.totalorder %s11, 8
      // Predicated region
      $region13: #{_lambda_.3} parent=5 // pred_check
        %p132 = pneg %p131
      $region14: #{_lambda_.3} parent=5 // pred_check_branch
        %134 = sbr.rel (%p132) target = $region16
      $region15: #{_lambda_.3} parent=5 // pred_region
        // Predicated region
        $region17: #{_lambda_.3} parent=15 // pred_check
          %p135 = pneg %p52
        $region18: #{_lambda_.3} parent=15 // pred_check_branch
          %137 = sbr.rel (%p135) target = $region20
        $region19: #{_lambda_.3} parent=15 // pred_region
          %p138 = scmp.lt.s32.totalorder %s18, 1
          %s139 = scalar_select %p138, %s18, 1
          %p140 = scmp.lt.s32.totalorder %s20, 3
          %s141 = scalar_select %p140, %s20, 3
          %s142 = smul.addr %s141, 2
          %s143 = smul.addr %s139, 8
          %s144 = sadd.s32 %s142, %s143
          %s145 = smul.addr %s144, 8
          %s146 = scalar_lea.vmem %s0, %s145
        $region20: #{_lambda_.3} parent=15 // pred_fallthru
          _
        // Predicated region
        $region21: #{_lambda_.3} parent=15 // pred_check
          %p147 = pneg %p82
        $region22: #{_lambda_.3} parent=15 // pred_check_branch
          %149 = sbr.rel (%p147) target = $region24
        $region23: #{_lambda_.3} parent=15 // pred_region
          %s150 = smul.u32 2, %s19
          %p151 = scmp.lt.s32.totalorder %s18, 1
          %s152 = scalar_select %p151, %s18, 1
          %p153 = scmp.lt.s32.totalorder %s20, 3
          %s154 = scalar_select %p153, %s20, 3
          %p155 = scmp.lt.s32.totalorder %s150, 1
          %s156 = scalar_select %p155, %s150, 1
          %s157 = smul.addr %s154, 2
          %s158 = sadd.s32 %s156, %s157
          %s159 = smul.addr %s152, 8
          %s160 = sadd.s32 %s158, %s159
          %s161 = smul.addr %s160, 8
          %s162 = scalar_lea.vmem %s1, %s161
          %s163 = smul.u32 2, %s19
        $region24: #{_lambda_.3} parent=15 // pred_fallthru
          _
      $region16: #{_lambda_.3} parent=5 // pred_fallthru
        _
      %p164 = scmp.le.s32.totalorder 1, %s11
      %p165 = scmp.lt.s32.totalorder %s11, 9
      %p166 = pnand %p164, %p165
      %p167 = pneg %p166
      // Predicated region
      $region25: #{_lambda_.3} parent=5 // pred_check
        _
      $region26: #{_lambda_.3} parent=5 // pred_check_branch
        %169 = sbr.rel (%p166) target = $region28
      $region27: #{_lambda_.3} parent=5 // pred_region
        %s170 = ssub.s32 %s11, 1
        %p171 = scmp.lt.s32.totalorder %s21, 1
        %s172 = scalar_select %p171, %s21, 1
        %p173 = scmp.lt.s32.totalorder %s23, 3
        %s174 = scalar_select %p173, %s23, 3
        %s175 = smul.addr %s174, 2
        %s176 = smul.addr %s172, 8
        %s177 = sadd.s32 %s175, %s176
        %s178 = smul.addr %s177, 8
        %s179 = scalar_lea.vmem %s0, %s178
        %p180 = pneg %p58
        %p181 = pneg %p55
        %s182 = smul.u32 2, %s22
        %p183 = scmp.lt.s32.totalorder %s21, 1
        %s184 = scalar_select %p183, %s21, 1
        %p185 = scmp.lt.s32.totalorder %s23, 3
        %s186 = scalar_select %p185, %s23, 3
        %p187 = scmp.lt.s32.totalorder %s182, 1
        %s188 = scalar_select %p187, %s182, 1
        %s189 = smul.addr %s186, 2
        %s190 = sadd.s32 %s188, %s189
        %s191 = smul.addr %s184, 8
        %s192 = sadd.s32 %s190, %s191
        %s193 = smul.addr %s192, 8
        %s194 = scalar_lea.vmem %s1, %s193
        %p195 = pneg %p88
        %p196 = pneg %p85
        %p197 = pneg %p116
        %p198 = pneg %p113
        %s199 = sand.u32 %s103, 1
        %s200 = scalar_lea.sflag [#allocation3], %s199
        %s201 = sand.u32 %s103, 1
        %s202 = smul.addr %s201, 16
        %s203 = scalar_lea.vmem [#allocation2], %s202
        %p204 = scmp.lt.s32.totalorder %s21, 1
        %s205 = scalar_select %p204, %s21, 1
        %p206 = scmp.lt.s32.totalorder %s23, 3
        %s207 = scalar_select %p206, %s23, 3
        %s208 = smul.addr %s207, 2
        %s209 = smul.addr %s205, 8
        %s210 = sadd.s32 %s208, %s209
        %s211 = smul.addr %s210, 8
        %s212 = scalar_lea.vmem %s0, %s211
        %s213 = smul.u32 2, %s22
        %p214 = scmp.lt.s32.totalorder %s21, 1
        %s215 = scalar_select %p214, %s21, 1
        %p216 = scmp.lt.s32.totalorder %s23, 3
        %s217 = scalar_select %p216, %s23, 3
        %p218 = scmp.lt.s32.totalorder %s213, 1
        %s219 = scalar_select %p218, %s213, 1
        %s220 = smul.addr %s217, 2
        %s221 = sadd.s32 %s219, %s220
        %s222 = smul.addr %s215, 8
        %s223 = sadd.s32 %s221, %s222
        %s224 = smul.addr %s223, 8
        %s225 = scalar_lea.vmem %s1, %s224
        %s226 = smul.u32 2, %s22
        %s227 = smul.u32 2, %s22
        %p229 = scmp.eq.s32.totalorder %s23, 0
        // Predicated region
        $region29: #{_lambda_.3} parent=27 // pred_check
          %p230 = pneg %p229
        $region30: #{_lambda_.3} parent=27 // pred_check_branch
          %232 = sbr.rel (%p230) target = $region32
        $region31: #{_lambda_.3} parent=27 // pred_region
          %vm233 = vcmask 261120
          %234 = vst.msk [vmem:[%s203] sm:$0xff] %vm233, 0.0
          %235 = vst.msk [vmem:[%s203 + $0x8] sm:$0xff] %vm233, 0.0
        $region32: #{_lambda_.3} parent=27 // pred_fallthru
          _
        %v236 = vld [vmem:[%s212] sm:$0xff]
        %v237 = vld [vmem:[%s212 + $0x8] sm:$0xff]
        %v238 = vld [vmem:[%s225] sm:$0xff]
        %v239 = vld [vmem:[%s225 + $0x8] sm:$0xff]
        %v240 = vpack.c.bf16 %v237, %v236
        %v241 = vmul.f32 %v236, %v236
        %v242 = vmul.f32 %v237, %v237
        %vm243 = vcmask 64512
        %v244 = vsel %vm243, %v241, 0.0
        %245 = vadd.xlane.f32.xlu0 %v244
        %v246 = vpop.xlane.xlu0 %245
        %v247 = vsel %vm243, %v242, 0.0
        %248 = vadd.xlane.f32.xlu0 %v247
        %v249 = vpop.xlane.xlu0 %248
        %v250 = vmul.f32 %v238, -2.0
        %v251 = vmul.f32 %v239, -2.0
        %v252 = vsel %vm243, %v250, 1.0
        %v253 = vsel %vm243, %v251, 1.0
        %v254 = vsel %vm243, %v236, %v246
        %v255 = vsel %vm243, %v237, %v249
        %vm256 = vcmask 72704
        %v258 = vsel %vm256, %v252, 0
        %v261 = vsel %vm256, %v253, 0
        %v264 = vsel %vm256, %v254, 0
        %v267 = vsel %vm256, %v255, 0
        %269 = vmatprep.subr.mxu0 0.0
        %270 = vmatpush1.xpose.msra.mxu0 %v264
        %271 = vmatprep.subr.mxu0 0.0
        %272 = vmatpush1.xpose.msra.mxu0 %v267
        %273 = vmatprep.subr.mxu0 0.0
        %274 = vmatpush1.xpose.msra.mxu0 0.0
        %275 = vmatprep.subr.mxu0 0.0
        %276 = vmatpush1.xpose.msra.mxu0 0.0
        %277 = vmatprep.subr.mxu0 0.0
        %278 = vmatpush1.xpose.msra.mxu0 0.0
        %279 = vmatprep.subr.mxu0 0.0
        %280 = vmatpush1.xpose.msra.mxu0 0.0
        %281 = vmatprep.subr.mxu0 0.0
        %282 = vmatpush1.xpose.msra.mxu0 0.0
        %283 = vmatprep.subr.mxu0 0.0
        %284 = vmatpush1.xpose.msra.mxu0 0.0
        %285 = vmatprep.subr.mxu0 0.0
        %286 = vmatpush1.xpose.msra.mxu0 0.0
        %287 = vmatprep.subr.mxu0 0.0
        %288 = vmatpush1.xpose.msra.mxu0 0.0
        %289 = vmatprep.subr.mxu0 0.0
        %290 = vmatpush1.xpose.msra.mxu0 0.0
        %291 = vmatprep.subr.mxu0 0.0
        %292 = vmatpush1.xpose.msra.mxu0 0.0
        %293 = vmatprep.subr.mxu0 0.0
        %294 = vmatpush1.xpose.msra.mxu0 0.0
        %295 = vmatprep.subr.mxu0 0.0
        %296 = vmatpush1.xpose.msra.mxu0 0.0
        %297 = vmatprep.subr.mxu0 0.0
        %298 = vmatpush1.xpose.msra.mxu0 0.0
        %299 = vmatprep.subr.mxu0 0.0
        %300 = vmatpush1.xpose.msra.mxu0 0.0
        %301 = vmatprep.subr.mxu0 0.0
        %302 = vmatpush1.xpose.msra.mxu0 0.0
        %303 = vmatprep.subr.mxu0 0.0
        %304 = vmatpush1.xpose.msra.mxu0 0.0
        %305 = vmatprep.subr.mxu0 0.0
        %306 = vmatpush1.xpose.msra.mxu0 0.0
        %307 = vmatprep.subr.mxu0 0.0
        %308 = vmatpush1.xpose.msra.mxu0 0.0
        %309 = vmatprep.subr.mxu0 0.0
        %310 = vmatpush1.xpose.msra.mxu0 0.0
        %311 = vmatprep.subr.mxu0 0.0
        %312 = vmatpush1.xpose.msra.mxu0 0.0
        %313 = vmatprep.subr.mxu0 0.0
        %314 = vmatpush1.xpose.msra.mxu0 0.0
        %315 = vmatprep.subr.mxu0 0.0
        %316 = vmatpush1.xpose.msra.mxu0 0.0
        %317 = vmatprep.subr.mxu0 0.0
        %318 = vmatpush1.xpose.msra.mxu0 0.0
        %319 = vmatprep.subr.mxu0 0.0
        %320 = vmatpush1.xpose.msra.mxu0 0.0
        %321 = vmatprep.subr.mxu0 0.0
        %322 = vmatpush1.xpose.msra.mxu0 0.0
        %323 = vmatprep.subr.mxu0 0.0
        %324 = vmatpush1.xpose.msra.mxu0 0.0
        %325 = vmatprep.subr.mxu0 0.0
        %326 = vmatpush1.xpose.msra.mxu0 0.0
        %327 = vmatprep.subr.mxu0 0.0
        %328 = vmatpush1.xpose.msra.mxu0 0.0
        %329 = vmatprep.subr.mxu0 0.0
        %330 = vmatpush1.xpose.msra.mxu0 0.0
        %331 = vmatprep.subr.mxu0 0.0
        %332 = vmatpush1.xpose.msra.mxu0 0.0
        %333 = vmatprep.mubr.f32.mxu0 0.0
        %334 = vmatmul.mubr.f32.gmra.mrb[0].mxu0 %v258
        %v335 = vpop.f32.mrb[0].mxu0
        %v336 = vadd.f32 0.0, %v335
        %v337 = vpop.f32.mrb[0].mxu0
        %338 = vmatprep.mubr.f32.mxu0 0.0
        %339 = vmatmul.mubr.f32.gmra.mrb[0].mxu0 %v261
        %v340 = vpop.f32.mrb[0].mxu0
        %v341 = vadd.f32 0.0, %v340
        %v342 = vpop.f32.mrb[0].mxu0
        %343 = vdwg.mxu0
        %v344 = vlaneseq
        %v345 = vand.u32 %v344, 127
        %v346 = vcvt.s32.f32 %v345
        %v347 = vlaneseq
        %v348 = vshrl.u32 %v347, 7
        %v349 = vadd.s32 %v348, 8
        %s350 = smul.u32 %s22, 16
        %v351 = vstv %s350
        %v352 = vadd.s32 %v348, %v351
        %v353 = vadd.s32 %v349, %v351
        %v354 = vcvt.s32.f32 %v352
        %v355 = vcvt.s32.f32 %v353
        %vm356 = vcmp.eq.f32.partialorder %v346, %v354
        %vm357 = vcmp.eq.f32.partialorder %v346, %v355
        %v358 = vsel %vm356, -1e+30, %v336
        %v359 = vsel %vm357, -1e+30, %v341
        %vm360 = vcmask 130048
        %v361 = vsel %vm360, %v358, inf
        %362 = vmin.xlane.f32.xlu0 %v361
        %v363 = vpop.xlane.xlu0 %362
        %v364 = vsel %vm360, %v359, inf
        %365 = vmin.xlane.f32.xlu0 %v364
        %v366 = vpop.xlane.xlu0 %365
        %vm367 = vcmp.le.f32.partialorder %v358, %v363
        %vm368 = vcmp.le.f32.partialorder %v359, %v366
        %v369 = vsel %vm367, %v346, 16.0
        %v370 = vsel %vm368, %v346, 16.0
        %v371 = vsel %vm360, %v369, inf
        %372 = vmin.xlane.f32.xlu0 %v371
        %v373 = vpop.xlane.xlu0 %372
        %v374 = vsel %vm360, %v370, inf
        %375 = vmin.xlane.f32.xlu0 %v374
        %v376 = vpop.xlane.xlu0 %375
        %vm377 = vcmp.eq.f32.partialorder %v346, %v373
        %vm378 = vcmp.eq.f32.partialorder %v346, %v376
        %v379 = vsel %vm377, 1e+30, %v358
        %v380 = vsel %vm378, 1e+30, %v359
        %v381 = vsel %vm377, 1, 0
        %v382 = vsel %vm378, 1, 0
        %v383 = vcvt.s32.f32 %v381
        %v384 = vcvt.s32.f32 %v382
        %v385 = vpack.c.bf16 %v384, %v383
        %v387 = vsel %vm360, %v385, 0
        %389 = vmatprep.subr.bf16.mxu0 0
        %390 = vmatpush1.bf16.msra.mxu0 %v240
        %391 = vmatprep.subr.bf16.mxu0 0
        %392 = vmatpush1.bf16.msra.mxu0 0
        %393 = vmatprep.subr.bf16.mxu0 0
        %394 = vmatpush1.bf16.msra.mxu0 0
        %395 = vmatprep.subr.bf16.mxu0 0
        %396 = vmatpush1.bf16.msra.mxu0 0
        %397 = vmatprep.subr.bf16.mxu0 0
        %398 = vmatpush1.bf16.msra.mxu0 0
        %399 = vmatprep.subr.bf16.mxu0 0
        %400 = vmatpush1.bf16.msra.mxu0 0
        %401 = vmatprep.subr.bf16.mxu0 0
        %402 = vmatpush1.bf16.msra.mxu0 0
        %403 = vmatprep.subr.bf16.mxu0 0
        %404 = vmatpush1.bf16.msra.mxu0 0
        %405 = vmatprep.subr.bf16.mxu0 0
        %406 = vmatpush1.bf16.msra.mxu0 0
        %407 = vmatprep.subr.bf16.mxu0 0
        %408 = vmatpush1.bf16.msra.mxu0 0
        %409 = vmatprep.subr.bf16.mxu0 0
        %410 = vmatpush1.bf16.msra.mxu0 0
        %411 = vmatprep.subr.bf16.mxu0 0
        %412 = vmatpush1.bf16.msra.mxu0 0
        %413 = vmatprep.subr.bf16.mxu0 0
        %414 = vmatpush1.bf16.msra.mxu0 0
        %415 = vmatprep.subr.bf16.mxu0 0
        %416 = vmatpush1.bf16.msra.mxu0 0
        %417 = vmatprep.subr.bf16.mxu0 0
        %418 = vmatpush1.bf16.msra.mxu0 0
        %419 = vmatprep.subr.bf16.mxu0 0
        %420 = vmatpush1.bf16.msra.mxu0 0
        %421 = vmatprep.mubr.bf16.mxu0 0
        %422 = vmatmul.mubr.bf16.gmra.mrb[0].mxu0 %v387
        %v423 = vpop.f32.mrb[0].mxu0
        %v424 = vadd.f32 0.0, %v423
        %v425 = vpop.f32.mrb[0].mxu0
        %v426 = vpop.f32.mrb[0].mxu0
        %v427 = vadd.f32 0.0, %v426
        %v428 = vpop.f32.mrb[0].mxu0
        %429 = vdwg.mxu0
        %432 = vrot.lane.b32.xlu0 %v238, 120
        %v433 = vpop.permute.xlu0 %432
        %434 = vrot.lane.b32.xlu0 %v239, 120
        %v435 = vpop.permute.xlu0 %434
        %v438 = vadd.f32 %v424, %v433
        %v439 = vadd.f32 %v427, %v435
        %vm440 = vcmp.gt.f32.partialorder %v438, 0.0
        %vm441 = vcmp.gt.f32.partialorder %v439, 0.0
        %v442 = vmul.f32 %v438, 0.2
        %v443 = vmul.f32 %v439, 0.2
        %v444 = vsel %vm440, %v438, %v442
        %v445 = vsel %vm441, %v439, %v443
        %v446 = vmax.f32 %v444, -1e+30
        %v447 = vmax.f32 %v445, -1e+30
        %v448 = vsub.f32 -1e+30, %v446
        %v449 = vsub.f32 -1e+30, %v447
        %v450 = vmul.f32 %v448, 1.442695
        %v451 = vpow.pop %v450
        %v452 = vmul.f32 %v449, 1.442695
        %v453 = vpow.pop %v452
        %v454 = vsub.f32 %v444, %v446
        %v455 = vsub.f32 %v445, %v447
        %v456 = vmul.f32 %v454, 1.442695
        %v457 = vpow.pop %v456
        %v458 = vmul.f32 %v455, 1.442695
        %v459 = vpow.pop %v458
        %v460 = vmul.f32 %v451, 0.0
        %v461 = vmul.f32 %v453, 0.0
        %v462 = vadd.f32 %v460, %v457
        %v463 = vadd.f32 %v461, %v459
        %466 = vrot.lane.b32.xlu0 %v424, 8
        %v467 = vpop.permute.xlu0 %466
        %468 = vrot.lane.b32.xlu0 %v427, 8
        %v469 = vpop.permute.xlu0 %468
        %v472 = vmul.f32 %v457, %v467
        %v473 = vmul.f32 %v459, %v469
        %v474 = vadd.f32 %v460, %v472
        %v475 = vadd.f32 %v461, %v473
        %v476 = vsel %vm360, %v379, inf
        %477 = vmin.xlane.f32.xlu0 %v476
        %v478 = vpop.xlane.xlu0 %477
        %v479 = vsel %vm360, %v380, inf
        %480 = vmin.xlane.f32.xlu0 %v479
        %v481 = vpop.xlane.xlu0 %480
        %vm482 = vcmp.le.f32.partialorder %v379, %v478
        %vm483 = vcmp.le.f32.partialorder %v380, %v481
        %v484 = vsel %vm482, %v346, 16.0
        %v485 = vsel %vm483, %v346, 16.0
        %v486 = vsel %vm360, %v484, inf
        %487 = vmin.xlane.f32.xlu0 %v486
        %v488 = vpop.xlane.xlu0 %487
        %v489 = vsel %vm360, %v485, inf
        %490 = vmin.xlane.f32.xlu0 %v489
        %v491 = vpop.xlane.xlu0 %490
        %vm492 = vcmp.eq.f32.partialorder %v346, %v488
        %vm493 = vcmp.eq.f32.partialorder %v346, %v491
        %v494 = vsel %vm492, 1e+30, %v379
        %v495 = vsel %vm493, 1e+30, %v380
        %v496 = vsel %vm492, 1, 0
        %v497 = vsel %vm493, 1, 0
        %v498 = vcvt.s32.f32 %v496
        %v499 = vcvt.s32.f32 %v497
        %v500 = vpack.c.bf16 %v499, %v498
        %v502 = vsel %vm360, %v500, 0
        %504 = vmatprep.subr.bf16.mxu0 0
        %505 = vmatpush1.bf16.msra.mxu0 %v240
        %506 = vmatprep.subr.bf16.mxu0 0
        %507 = vmatpush1.bf16.msra.mxu0 0
        %508 = vmatprep.subr.bf16.mxu0 0
        %509 = vmatpush1.bf16.msra.mxu0 0
        %510 = vmatprep.subr.bf16.mxu0 0
        %511 = vmatpush1.bf16.msra.mxu0 0
        %512 = vmatprep.subr.bf16.mxu0 0
        %513 = vmatpush1.bf16.msra.mxu0 0
        %514 = vmatprep.subr.bf16.mxu0 0
        %515 = vmatpush1.bf16.msra.mxu0 0
        %516 = vmatprep.subr.bf16.mxu0 0
        %517 = vmatpush1.bf16.msra.mxu0 0
        %518 = vmatprep.subr.bf16.mxu0 0
        %519 = vmatpush1.bf16.msra.mxu0 0
        %520 = vmatprep.subr.bf16.mxu0 0
        %521 = vmatpush1.bf16.msra.mxu0 0
        %522 = vmatprep.subr.bf16.mxu0 0
        %523 = vmatpush1.bf16.msra.mxu0 0
        %524 = vmatprep.subr.bf16.mxu0 0
        %525 = vmatpush1.bf16.msra.mxu0 0
        %526 = vmatprep.subr.bf16.mxu0 0
        %527 = vmatpush1.bf16.msra.mxu0 0
        %528 = vmatprep.subr.bf16.mxu0 0
        %529 = vmatpush1.bf16.msra.mxu0 0
        %530 = vmatprep.subr.bf16.mxu0 0
        %531 = vmatpush1.bf16.msra.mxu0 0
        %532 = vmatprep.subr.bf16.mxu0 0
        %533 = vmatpush1.bf16.msra.mxu0 0
        %534 = vmatprep.subr.bf16.mxu0 0
        %535 = vmatpush1.bf16.msra.mxu0 0
        %536 = vmatprep.mubr.bf16.mxu0 0
        %537 = vmatmul.mubr.bf16.gmra.mrb[0].mxu0 %v502
        %v538 = vpop.f32.mrb[0].mxu0
        %v539 = vadd.f32 0.0, %v538
        %v540 = vpop.f32.mrb[0].mxu0
        %v541 = vpop.f32.mrb[0].mxu0
        %v542 = vadd.f32 0.0, %v541
        %v543 = vpop.f32.mrb[0].mxu0
        %544 = vdwg.mxu0
        %v545 = vadd.f32 %v539, %v433
        %v546 = vadd.f32 %v542, %v435
        %vm547 = vcmp.gt.f32.partialorder %v545, 0.0
        %vm548 = vcmp.gt.f32.partialorder %v546, 0.0
        %v549 = vmul.f32 %v545, 0.2
        %v550 = vmul.f32 %v546, 0.2
        %v551 = vsel %vm547, %v545, %v549
        %v552 = vsel %vm548, %v546, %v550
        %v553 = vmax.f32 %v446, %v551
        %v554 = vmax.f32 %v447, %v552
        %v555 = vsub.f32 %v446, %v553
        %v556 = vsub.f32 %v447, %v554
        %v557 = vmul.f32 %v555, 1.442695
        %v558 = vpow.pop %v557
        %v559 = vmul.f32 %v556, 1.442695
        %v560 = vpow.pop %v559
        %v561 = vsub.f32 %v551, %v553
        %v562 = vsub.f32 %v552, %v554
        %v563 = vmul.f32 %v561, 1.442695
        %v564 = vpow.pop %v563
        %v565 = vmul.f32 %v562, 1.442695
        %v566 = vpow.pop %v565
        %v567 = vmul.f32 %v558, %v462
        %v568 = vmul.f32 %v560, %v463
        %v569 = vadd.f32 %v567, %v564
        %v570 = vadd.f32 %v568, %v566
        %v571 = vmul.f32 %v558, %v474
        %v572 = vmul.f32 %v560, %v475
        %575 = vrot.lane.b32.xlu0 %v539, 8
        %v576 = vpop.permute.xlu0 %575
        %577 = vrot.lane.b32.xlu0 %v542, 8
        %v578 = vpop.permute.xlu0 %577
        %v581 = vmul.f32 %v564, %v576
        %v582 = vmul.f32 %v566, %v578
        %v583 = vadd.f32 %v571, %v581
        %v584 = vadd.f32 %v572, %v582
        %v585 = vsel %vm360, %v494, inf
        %586 = vmin.xlane.f32.xlu0 %v585
        %v587 = vpop.xlane.xlu0 %586
        %v588 = vsel %vm360, %v495, inf
        %589 = vmin.xlane.f32.xlu0 %v588
        %v590 = vpop.xlane.xlu0 %589
        %vm591 = vcmp.le.f32.partialorder %v494, %v587
        %vm592 = vcmp.le.f32.partialorder %v495, %v590
        %v593 = vsel %vm591, %v346, 16.0
        %v594 = vsel %vm592, %v346, 16.0
        %v595 = vsel %vm360, %v593, inf
        %596 = vmin.xlane.f32.xlu0 %v595
        %v597 = vpop.xlane.xlu0 %596
        %v598 = vsel %vm360, %v594, inf
        %599 = vmin.xlane.f32.xlu0 %v598
        %v600 = vpop.xlane.xlu0 %599
        %vm601 = vcmp.eq.f32.partialorder %v346, %v597
        %vm602 = vcmp.eq.f32.partialorder %v346, %v600
        %v603 = vsel %vm601, 1e+30, %v494
        %v604 = vsel %vm602, 1e+30, %v495
        %v605 = vsel %vm601, 1, 0
        %v606 = vsel %vm602, 1, 0
        %v607 = vcvt.s32.f32 %v605
        %v608 = vcvt.s32.f32 %v606
        %v609 = vpack.c.bf16 %v608, %v607
        %v611 = vsel %vm360, %v609, 0
        %613 = vmatprep.subr.bf16.mxu0 0
        %614 = vmatpush1.bf16.msra.mxu0 %v240
        %615 = vmatprep.subr.bf16.mxu0 0
        %616 = vmatpush1.bf16.msra.mxu0 0
        %617 = vmatprep.subr.bf16.mxu0 0
        %618 = vmatpush1.bf16.msra.mxu0 0
        %619 = vmatprep.subr.bf16.mxu0 0
        %620 = vmatpush1.bf16.msra.mxu0 0
        %621 = vmatprep.subr.bf16.mxu0 0
        %622 = vmatpush1.bf16.msra.mxu0 0
        %623 = vmatprep.subr.bf16.mxu0 0
        %624 = vmatpush1.bf16.msra.mxu0 0
        %625 = vmatprep.subr.bf16.mxu0 0
        %626 = vmatpush1.bf16.msra.mxu0 0
        %627 = vmatprep.subr.bf16.mxu0 0
        %628 = vmatpush1.bf16.msra.mxu0 0
        %629 = vmatprep.subr.bf16.mxu0 0
        %630 = vmatpush1.bf16.msra.mxu0 0
        %631 = vmatprep.subr.bf16.mxu0 0
        %632 = vmatpush1.bf16.msra.mxu0 0
        %633 = vmatprep.subr.bf16.mxu0 0
        %634 = vmatpush1.bf16.msra.mxu0 0
        %635 = vmatprep.subr.bf16.mxu0 0
        %636 = vmatpush1.bf16.msra.mxu0 0
        %637 = vmatprep.subr.bf16.mxu0 0
        %638 = vmatpush1.bf16.msra.mxu0 0
        %639 = vmatprep.subr.bf16.mxu0 0
        %640 = vmatpush1.bf16.msra.mxu0 0
        %641 = vmatprep.subr.bf16.mxu0 0
        %642 = vmatpush1.bf16.msra.mxu0 0
        %643 = vmatprep.subr.bf16.mxu0 0
        %644 = vmatpush1.bf16.msra.mxu0 0
        %645 = vmatprep.mubr.bf16.mxu0 0
        %646 = vmatmul.mubr.bf16.gmra.mrb[0].mxu0 %v611
        %v647 = vpop.f32.mrb[0].mxu0
        %v648 = vadd.f32 0.0, %v647
        %v649 = vpop.f32.mrb[0].mxu0
        %v650 = vpop.f32.mrb[0].mxu0
        %v651 = vadd.f32 0.0, %v650
        %v652 = vpop.f32.mrb[0].mxu0
        %653 = vdwg.mxu0
        %v654 = vadd.f32 %v648, %v433
        %v655 = vadd.f32 %v651, %v435
        %vm656 = vcmp.gt.f32.partialorder %v654, 0.0
        %vm657 = vcmp.gt.f32.partialorder %v655, 0.0
        %v658 = vmul.f32 %v654, 0.2
        %v659 = vmul.f32 %v655, 0.2
        %v660 = vsel %vm656, %v654, %v658
        %v661 = vsel %vm657, %v655, %v659
        %v662 = vmax.f32 %v553, %v660
        %v663 = vmax.f32 %v554, %v661
        %v664 = vsub.f32 %v553, %v662
        %v665 = vsub.f32 %v554, %v663
        %v666 = vmul.f32 %v664, 1.442695
        %v667 = vpow.pop %v666
        %v668 = vmul.f32 %v665, 1.442695
        %v669 = vpow.pop %v668
        %v670 = vsub.f32 %v660, %v662
        %v671 = vsub.f32 %v661, %v663
        %v672 = vmul.f32 %v670, 1.442695
        %v673 = vpow.pop %v672
        %v674 = vmul.f32 %v671, 1.442695
        %v675 = vpow.pop %v674
        %v676 = vmul.f32 %v667, %v569
        %v677 = vmul.f32 %v669, %v570
        %v678 = vadd.f32 %v676, %v673
        %v679 = vadd.f32 %v677, %v675
        %v680 = vmul.f32 %v667, %v583
        %v681 = vmul.f32 %v669, %v584
        %684 = vrot.lane.b32.xlu0 %v648, 8
        %v685 = vpop.permute.xlu0 %684
        %686 = vrot.lane.b32.xlu0 %v651, 8
        %v687 = vpop.permute.xlu0 %686
        %v690 = vmul.f32 %v673, %v685
        %v691 = vmul.f32 %v675, %v687
        %v692 = vadd.f32 %v680, %v690
        %v693 = vadd.f32 %v681, %v691
        %v694 = vsel %vm360, %v603, inf
        %695 = vmin.xlane.f32.xlu0 %v694
        %v696 = vpop.xlane.xlu0 %695
        %v697 = vsel %vm360, %v604, inf
        %698 = vmin.xlane.f32.xlu0 %v697
        %v699 = vpop.xlane.xlu0 %698
        %vm700 = vcmp.le.f32.partialorder %v603, %v696
        %vm701 = vcmp.le.f32.partialorder %v604, %v699
        %v702 = vsel %vm700, %v346, 16.0
        %v703 = vsel %vm701, %v346, 16.0
        %v704 = vsel %vm360, %v702, inf
        %705 = vmin.xlane.f32.xlu0 %v704
        %v706 = vpop.xlane.xlu0 %705
        %v707 = vsel %vm360, %v703, inf
        %708 = vmin.xlane.f32.xlu0 %v707
        %v709 = vpop.xlane.xlu0 %708
        %vm710 = vcmp.eq.f32.partialorder %v346, %v706
        %vm711 = vcmp.eq.f32.partialorder %v346, %v709
        %v712 = vsel %vm710, 1, 0
        %v713 = vsel %vm711, 1, 0
        %v714 = vcvt.s32.f32 %v712
        %v715 = vcvt.s32.f32 %v713
        %v716 = vpack.c.bf16 %v715, %v714
        %v718 = vsel %vm360, %v716, 0
        %720 = vmatprep.subr.bf16.mxu0 0
        %721 = vmatpush1.bf16.msra.mxu0 %v240
        %722 = vmatprep.subr.bf16.mxu0 0
        %723 = vmatpush1.bf16.msra.mxu0 0
        %724 = vmatprep.subr.bf16.mxu0 0
        %725 = vmatpush1.bf16.msra.mxu0 0
        %726 = vmatprep.subr.bf16.mxu0 0
        %727 = vmatpush1.bf16.msra.mxu0 0
        %728 = vmatprep.subr.bf16.mxu0 0
        %729 = vmatpush1.bf16.msra.mxu0 0
        %730 = vmatprep.subr.bf16.mxu0 0
        %731 = vmatpush1.bf16.msra.mxu0 0
        %732 = vmatprep.subr.bf16.mxu0 0
        %733 = vmatpush1.bf16.msra.mxu0 0
        %734 = vmatprep.subr.bf16.mxu0 0
        %735 = vmatpush1.bf16.msra.mxu0 0
        %736 = vmatprep.subr.bf16.mxu0 0
        %737 = vmatpush1.bf16.msra.mxu0 0
        %738 = vmatprep.subr.bf16.mxu0 0
        %739 = vmatpush1.bf16.msra.mxu0 0
        %740 = vmatprep.subr.bf16.mxu0 0
        %741 = vmatpush1.bf16.msra.mxu0 0
        %742 = vmatprep.subr.bf16.mxu0 0
        %743 = vmatpush1.bf16.msra.mxu0 0
        %744 = vmatprep.subr.bf16.mxu0 0
        %745 = vmatpush1.bf16.msra.mxu0 0
        %746 = vmatprep.subr.bf16.mxu0 0
        %747 = vmatpush1.bf16.msra.mxu0 0
        %748 = vmatprep.subr.bf16.mxu0 0
        %749 = vmatpush1.bf16.msra.mxu0 0
        %750 = vmatprep.subr.bf16.mxu0 0
        %751 = vmatpush1.bf16.msra.mxu0 0
        %752 = vmatprep.mubr.bf16.mxu0 0
        %753 = vmatmul.mubr.bf16.gmra.mrb[0].mxu0 %v718
        %v754 = vpop.f32.mrb[0].mxu0
        %v755 = vadd.f32 0.0, %v754
        %v756 = vpop.f32.mrb[0].mxu0
        %v757 = vpop.f32.mrb[0].mxu0
        %v758 = vadd.f32 0.0, %v757
        %v759 = vpop.f32.mrb[0].mxu0
        %760 = vdwg.mxu0
        %v761 = vadd.f32 %v755, %v433
        %v762 = vadd.f32 %v758, %v435
        %vm763 = vcmp.gt.f32.partialorder %v761, 0.0
        %vm764 = vcmp.gt.f32.partialorder %v762, 0.0
        %v765 = vmul.f32 %v761, 0.2
        %v766 = vmul.f32 %v762, 0.2
        %v767 = vsel %vm763, %v761, %v765
        %v768 = vsel %vm764, %v762, %v766
        %v769 = vmax.f32 %v662, %v767
        %v770 = vmax.f32 %v663, %v768
        %v771 = vsub.f32 %v662, %v769
        %v772 = vsub.f32 %v663, %v770
        %v773 = vmul.f32 %v771, 1.442695
        %v774 = vpow.pop %v773
        %v775 = vmul.f32 %v772, 1.442695
        %v776 = vpow.pop %v775
        %v777 = vsub.f32 %v767, %v769
        %v778 = vsub.f32 %v768, %v770
        %v779 = vmul.f32 %v777, 1.442695
        %v780 = vpow.pop %v779
        %v781 = vmul.f32 %v778, 1.442695
        %v782 = vpow.pop %v781
        %v783 = vmul.f32 %v774, %v678
        %v784 = vmul.f32 %v776, %v679
        %v785 = vadd.f32 %v783, %v780
        %v786 = vadd.f32 %v784, %v782
        %v787 = vmul.f32 %v774, %v692
        %v788 = vmul.f32 %v776, %v693
        %791 = vrot.lane.b32.xlu0 %v755, 8
        %v792 = vpop.permute.xlu0 %791
        %793 = vrot.lane.b32.xlu0 %v758, 8
        %v794 = vpop.permute.xlu0 %793
        %v797 = vmul.f32 %v780, %v792
        %v798 = vmul.f32 %v782, %v794
        %v799 = vadd.f32 %v787, %v797
        %v800 = vadd.f32 %v788, %v798
        %v801 = vrcp.pop %v785
        %v802 = vmul.f32 %v799, %v801
        %v803 = vrcp.pop %v786
        %v804 = vmul.f32 %v800, %v803
        %vm805 = vcmp.gt.f32.partialorder %v802, 0.0
        %vm806 = vcmp.gt.f32.partialorder %v804, 0.0
        %v807 = vmin.f32 %v802, 0.0
        %v808 = vmin.f32 %v804, 0.0
        %v809 = vmul.f32 %v807, 1.442695
        %v810 = vpow.pop %v809
        %v811 = vmul.f32 %v808, 1.442695
        %v812 = vpow.pop %v811
        %v813 = vsub.f32 %v810, 1.0
        %v814 = vsub.f32 %v812, 1.0
        %v815 = vsel %vm805, %v802, %v813
        %v816 = vsel %vm806, %v804, %v814
        %s817 = smul.u32 %s23, 8
        %v818 = vstv %s817
        %v819 = vadd.s32 %v348, %v818
        %vm820 = vcmp.eq.s32.totalorder %v345, %v819
        %v821 = vsel %vm820, 1, 0
        %v822 = vcvt.s32.f32 %v821
        %v823 = vld [vmem:[%s203] sm:$0xff]
        %v824 = vld [vmem:[%s203 + $0x8] sm:$0xff]
        %827 = vrot.lane.b32.xlu0 %v815, 120
        %v828 = vpop.permute.xlu0 %827
        %829 = vrot.lane.b32.xlu0 %v816, 120
        %v830 = vpop.permute.xlu0 %829
        %v831 = vsel %vm243, %v828, 0
        %v833 = vsel %vm243, %v830, 0
        %835 = vmatprep.subr.mxu0 0.0
        %836 = vmatpush1.msra.mxu0 %v822
        %837 = vmatprep.subr.mxu0 0.0
        %838 = vmatpush1.msra.mxu0 0.0
        %839 = vmatprep.subr.mxu0 0.0
        %840 = vmatpush1.msra.mxu0 0.0
        %841 = vmatprep.subr.mxu0 0.0
        %842 = vmatpush1.msra.mxu0 0.0
        %843 = vmatprep.subr.mxu0 0.0
        %844 = vmatpush1.msra.mxu0 0.0
        %845 = vmatprep.subr.mxu0 0.0
        %846 = vmatpush1.msra.mxu0 0.0
        %847 = vmatprep.subr.mxu0 0.0
        %848 = vmatpush1.msra.mxu0 0.0
        %849 = vmatprep.subr.mxu0 0.0
        %850 = vmatpush1.msra.mxu0 0.0
        %851 = vmatprep.subr.mxu0 0.0
        %852 = vmatpush1.msra.mxu0 0.0
        %853 = vmatprep.subr.mxu0 0.0
        %854 = vmatpush1.msra.mxu0 0.0
        %855 = vmatprep.subr.mxu0 0.0
        %856 = vmatpush1.msra.mxu0 0.0
        %857 = vmatprep.subr.mxu0 0.0
        %858 = vmatpush1.msra.mxu0 0.0
        %859 = vmatprep.subr.mxu0 0.0
        %860 = vmatpush1.msra.mxu0 0.0
        %861 = vmatprep.subr.mxu0 0.0
        %862 = vmatpush1.msra.mxu0 0.0
        %863 = vmatprep.subr.mxu0 0.0
        %864 = vmatpush1.msra.mxu0 0.0
        %865 = vmatprep.subr.mxu0 0.0
        %866 = vmatpush1.msra.mxu0 0.0
        %867 = vmatprep.subr.mxu0 0.0
        %868 = vmatpush1.msra.mxu0 0.0
        %869 = vmatprep.subr.mxu0 0.0
        %870 = vmatpush1.msra.mxu0 0.0
        %871 = vmatprep.subr.mxu0 0.0
        %872 = vmatpush1.msra.mxu0 0.0
        %873 = vmatprep.subr.mxu0 0.0
        %874 = vmatpush1.msra.mxu0 0.0
        %875 = vmatprep.subr.mxu0 0.0
        %876 = vmatpush1.msra.mxu0 0.0
        %877 = vmatprep.subr.mxu0 0.0
        %878 = vmatpush1.msra.mxu0 0.0
        %879 = vmatprep.subr.mxu0 0.0
        %880 = vmatpush1.msra.mxu0 0.0
        %881 = vmatprep.subr.mxu0 0.0
        %882 = vmatpush1.msra.mxu0 0.0
        %883 = vmatprep.subr.mxu0 0.0
        %884 = vmatpush1.msra.mxu0 0.0
        %885 = vmatprep.subr.mxu0 0.0
        %886 = vmatpush1.msra.mxu0 0.0
        %887 = vmatprep.subr.mxu0 0.0
        %888 = vmatpush1.msra.mxu0 0.0
        %889 = vmatprep.subr.mxu0 0.0
        %890 = vmatpush1.msra.mxu0 0.0
        %891 = vmatprep.subr.mxu0 0.0
        %892 = vmatpush1.msra.mxu0 0.0
        %893 = vmatprep.subr.mxu0 0.0
        %894 = vmatpush1.msra.mxu0 0.0
        %895 = vmatprep.subr.mxu0 0.0
        %896 = vmatpush1.msra.mxu0 0.0
        %897 = vmatprep.subr.mxu0 0.0
        %898 = vmatpush1.msra.mxu0 0.0
        %899 = vmatprep.mubr.f32.mxu0 0.0
        %900 = vmatmul.mubr.f32.gmra.mrb[0].mxu0 %v831
        %v901 = vpop.f32.mrb[0].mxu0
        %v902 = vadd.f32 0.0, %v901
        %v903 = vpop.f32.mrb[0].mxu0
        %904 = vmatprep.mubr.f32.mxu0 0.0
        %905 = vmatmul.mubr.f32.gmra.mrb[0].mxu0 %v833
        %v906 = vpop.f32.mrb[0].mxu0
        %v907 = vadd.f32 0.0, %v906
        %v908 = vpop.f32.mrb[0].mxu0
        %909 = vdwg.mxu0
        %v910 = vadd.f32 %v823, %v902
        %v911 = vadd.f32 %v824, %v907
        %vm912 = vcmask 261120
        %913 = vst.msk [vmem:[%s203] sm:$0xff] %vm912, %v910
        %914 = vst.msk [vmem:[%s203 + $0x8] sm:$0xff] %vm912, %v911
        %s915 = sand.u32 %s103, 1
        %s916 = scalar_lea.sflag [#allocation3], %s915
        %s917 = sand.u32 %s103, 1
        %s918 = smul.addr %s917, 16
        %s919 = scalar_lea.vmem [#allocation2], %s918
        // Predicated region
        $region33: #{_lambda_.3} parent=27 // pred_check
          %p920 = pneg %p113
        $region34: #{_lambda_.3} parent=27 // pred_check_branch
          %922 = sbr.rel (%p920) target = $region36
        $region35: #{_lambda_.3} parent=27 // pred_region
          %s923 = smul.u32 2, %s22
          %s925 = ssub.s32 256, 256
          %926 = vsyncadd %s916, %s925
          %s927 = smul.addr %s21, 2
          %s928 = sadd.s32 %s923, %s927
          %s929 = smul.addr %s928, 128
          %s930 = scalar_lea.hbm %s2, %s929
          %s931 = sshll.u32 %s919, 4
          %s932 = int_to_ptr.vmem [resolvable:$true] %s931
          %937 = dma.vmem_to_hbm [thread:$0]  %s932, 256, %s930, %s916, 128, 128, 8
        $region36: #{_lambda_.3} parent=27 // pred_fallthru
          _
      $region28: #{_lambda_.3} parent=5 // pred_fallthru
        _
      %p938 = scmp.le.s32.totalorder 2, %s11
      // Predicated region
      $region37: #{_lambda_.3} parent=5 // pred_check
        %p939 = pneg %p938
      $region38: #{_lambda_.3} parent=5 // pred_check_branch
        %941 = sbr.rel (%p939) target = $region40
      $region39: #{_lambda_.3} parent=5 // pred_region
        %s942 = ssub.s32 %s11, 2
        // Predicated region
        $region41: #{_lambda_.3} parent=39 // pred_check
          %p943 = pneg %p119
        $region42: #{_lambda_.3} parent=39 // pred_check_branch
          %945 = sbr.rel (%p943) target = $region44
        $region43: #{_lambda_.3} parent=39 // pred_region
          %s946 = sand.u32 %s104, 1
          %s947 = scalar_lea.sflag [#allocation3], %s946
          %s948 = sand.u32 %s104, 1
          %s949 = smul.addr %s948, 16
          %s950 = scalar_lea.vmem [#allocation2], %s949
          %951 = dma.done %s947, 256
        $region44: #{_lambda_.3} parent=39 // pred_fallthru
          _
      $region40: #{_lambda_.3} parent=5 // pred_fallthru
        _
    $region6: #{_lambda_.3} parent=1 // loop_footer
      %s15 = sadd.s32 1, %s11
    $region7: #{_lambda_.3} parent=1 // loop_footer_branch
      %10 = sbr.rel target = $region3
    $region8: #{_lambda_.3} parent=1 // loop_exit
      _
    %952 = vsyncpa [#allocation3], 1
    %s953 = scalar_lea.sflag [#allocation3], 1
    %954 = vsyncpa %s953, 1

// kernel: _lambda_.2
$region0: #{_lambda_.2}
  #allocation0 [shape = 'u32[]', space=smem, size = 0x4, offset = 0x4, fixed_abs, tag = 'smem constant byte address 0x4 - core index']
  #allocation1 [shape = 'u32[144,128]{1,0:T(1,128)}', space=vmem, size = 0x12000, scoped, tag = 'internal scratch']
  %s0 = inlined_call_operand.vmem [shape: f32[2,16,4], index: 0, kind: input, shape index: {}]
  %s1 = inlined_call_operand.vmem [shape: f32[4,32], index: 1, kind: input, shape index: {}]
  %s2 = inlined_call_operand.vmem [shape: f32[4,8,8], index: 2, kind: input, shape index: {}]
  %s3 = inlined_call_operand.vmem [shape: f32[4,8,8], index: 3, kind: input, shape index: {}]
  %s4 = inlined_call_operand.vmem [shape: f32[2,4,16,24], index: 4, kind: output, shape index: {}]
  %s5 = sld [smem:[#allocation0]]
  $region49: #{_lambda_.2} parent=0
    _
  %s7 = ssub.s32 1, %s5
  %s8 = scalar_select 0, %s7, %s5
  loop: start=0, step=1, limit=4
  $region2: #{_lambda_.2} parent=0 // loop_pre_header
    _
  $region3: #{_lambda_.2} parent=0 // loop_header
    %s10 = sphi 0, %s14
    %p11 = scmp.ge.s32.totalorder %s10, 4
    %s17 = sphi 0, %s29
    %s18 = sphi 0, %s25
    %s19 = sphi 0, %s17
    %s20 = sphi 0, %s18
    %s21 = sphi 0, %s19
    %s22 = sphi 0, %s20
    %s34 = sphi 0, %s36
    %s37 = sphi 0, %s34
    %s38 = sphi 0, %s37
    %s54 = sphi 0, %s38
    %s58 = sphi 0, %s58
    %s60 = sphi 0, %s58
    %s61 = sphi 0, %s60
    %s75 = sphi 0, %s61
    %s79 = sphi 0, %s79
    %s81 = sphi 0, %s79
    %s82 = sphi 0, %s81
    %s96 = sphi 0, %s82
    %s100 = sphi 0, %s100
    %s102 = sphi 0, %s100
    %s103 = sphi 0, %s102
    %s117 = sphi 0, %s103
    %s125 = sphi 0, %s127
    %s128 = sphi 0, %s125
    %s129 = sphi 0, %s128
    %s145 = sphi 0, %s129
  $region4: #{_lambda_.2} parent=0 // loop_header_branch
    %13 = sbr.rel (%p11) target = $region8
  $region5: #{_lambda_.2} parent=0 // loop_body
    %s15 = ssub.s32 %s10, 1
    %s16 = ssub.s32 %s10, 2
    %s23 = sadd.s32 1, %s18
    %p24 = scmp.ge.s32.totalorder %s23, 1
    %s25 = scalar_select %p24, 0, %s23
    %s26 = sadd.s32 1, %s17
    %s27 = scalar_select %p24, %s26, %s17
    %p28 = scmp.ge.s32.totalorder %s27, 2
    %s29 = scalar_select %p28, 0, %s27
    %s30 = ssub.s32 %s17, %s29
    %s31 = ssub.s32 %s18, %s25
    %s32 = sor.u32 %s30, %s31
    %p33 = scmp.eq.s32.totalorder %s32, 0
    %s35 = sadd.s32 %s34, 1
    %s36 = scalar_select %p33, %s34, %s35
    %p39 = pneg %p33
    %p40 = scmp.eq.s32.totalorder %s10, 1
    %p41 = por %p39, %p40
    %p42 = scmp.ne.s32.totalorder %s34, %s37
    %p43 = scmp.eq.s32.totalorder %s10, 0
    %p44 = por %p42, %p43
    %p45 = scmp.ne.s32.totalorder %s34, %s37
    %p46 = scmp.eq.s32.totalorder %s15, 1
    %p47 = por %p45, %p46
    %p48 = scmp.ne.s32.totalorder %s37, %s38
    %p49 = scmp.eq.s32.totalorder %s15, 0
    %p50 = por %p48, %p49
    %p51 = scmp.ne.s32.totalorder %s37, %s38
    %p52 = scmp.eq.s32.totalorder %s16, 1
    %p53 = por %p51, %p52
    %p55 = scmp.ne.s32.totalorder %s38, %s54
    %p56 = scmp.eq.s32.totalorder %s16, 0
    %p57 = por %p55, %p56
    %s59 = sadd.s32 %s58, 1
    %p62 = scmp.eq.s32.totalorder %s10, 1
    %p63 = scmp.ne.s32.totalorder %s58, %s60
    %p64 = scmp.eq.s32.totalorder %s10, 0
    %p65 = por %p63, %p64
    %p66 = scmp.ne.s32.totalorder %s58, %s60
    %p67 = scmp.eq.s32.totalorder %s15, 1
    %p68 = por %p66, %p67
    %p69 = scmp.ne.s32.totalorder %s60, %s61
    %p70 = scmp.eq.s32.totalorder %s15, 0
    %p71 = por %p69, %p70
    %p72 = scmp.ne.s32.totalorder %s60, %s61
    %p73 = scmp.eq.s32.totalorder %s16, 1
    %p74 = por %p72, %p73
    %p76 = scmp.ne.s32.totalorder %s61, %s75
    %p77 = scmp.eq.s32.totalorder %s16, 0
    %p78 = por %p76, %p77
    %s80 = sadd.s32 %s79, 1
    %p83 = scmp.eq.s32.totalorder %s10, 1
    %p84 = scmp.ne.s32.totalorder %s79, %s81
    %p85 = scmp.eq.s32.totalorder %s10, 0
    %p86 = por %p84, %p85
    %p87 = scmp.ne.s32.totalorder %s79, %s81
    %p88 = scmp.eq.s32.totalorder %s15, 1
    %p89 = por %p87, %p88
    %p90 = scmp.ne.s32.totalorder %s81, %s82
    %p91 = scmp.eq.s32.totalorder %s15, 0
    %p92 = por %p90, %p91
    %p93 = scmp.ne.s32.totalorder %s81, %s82
    %p94 = scmp.eq.s32.totalorder %s16, 1
    %p95 = por %p93, %p94
    %p97 = scmp.ne.s32.totalorder %s82, %s96
    %p98 = scmp.eq.s32.totalorder %s16, 0
    %p99 = por %p97, %p98
    %s101 = sadd.s32 %s100, 1
    %p104 = scmp.eq.s32.totalorder %s10, 1
    %p105 = scmp.ne.s32.totalorder %s100, %s102
    %p106 = scmp.eq.s32.totalorder %s10, 0
    %p107 = por %p105, %p106
    %p108 = scmp.ne.s32.totalorder %s100, %s102
    %p109 = scmp.eq.s32.totalorder %s15, 1
    %p110 = por %p108, %p109
    %p111 = scmp.ne.s32.totalorder %s102, %s103
    %p112 = scmp.eq.s32.totalorder %s15, 0
    %p113 = por %p111, %p112
    %p114 = scmp.ne.s32.totalorder %s102, %s103
    %p115 = scmp.eq.s32.totalorder %s16, 1
    %p116 = por %p114, %p115
    %p118 = scmp.ne.s32.totalorder %s103, %s117
    %p119 = scmp.eq.s32.totalorder %s16, 0
    %p120 = por %p118, %p119
    %s121 = ssub.s32 %s17, %s29
    %s122 = ssub.s32 %s18, %s25
    %s123 = sor.u32 %s121, %s122
    %p124 = scmp.eq.s32.totalorder %s123, 0
    %s126 = sadd.s32 %s125, 1
    %s127 = scalar_select %p124, %s125, %s126
    %p130 = pneg %p124
    %p131 = scmp.eq.s32.totalorder %s10, 1
    %p132 = por %p130, %p131
    %p133 = scmp.ne.s32.totalorder %s125, %s128
    %p134 = scmp.eq.s32.totalorder %s10, 0
    %p135 = por %p133, %p134
    %p136 = scmp.ne.s32.totalorder %s125, %s128
    %p137 = scmp.eq.s32.totalorder %s15, 1
    %p138 = por %p136, %p137
    %p139 = scmp.ne.s32.totalorder %s128, %s129
    %p140 = scmp.eq.s32.totalorder %s15, 0
    %p141 = por %p139, %p140
    %p142 = scmp.ne.s32.totalorder %s128, %s129
    %p143 = scmp.eq.s32.totalorder %s16, 1
    %p144 = por %p142, %p143
    %p146 = scmp.ne.s32.totalorder %s129, %s145
    %p147 = scmp.eq.s32.totalorder %s16, 0
    %p148 = por %p146, %p147
    %p149 = scmp.le.s32.totalorder 1, %s10
    %p150 = scmp.lt.s32.totalorder %s10, 3
    %p151 = pnand %p149, %p150
    %p152 = pneg %p151
    // Predicated region
    $region9: #{_lambda_.2} parent=5 // pred_check
      _
    $region10: #{_lambda_.2} parent=5 // pred_check_branch
      %154 = sbr.rel (%p151) target = $region12
    $region11: #{_lambda_.2} parent=5 // pred_region
      %s155 = ssub.s32 %s10, 1
      // Predicated region
      $region13: #{_lambda_.2} parent=11 // pred_check
        %p156 = pneg %p71
      $region14: #{_lambda_.2} parent=11 // pred_check_branch
        %158 = sbr.rel (%p156) target = $region16
      $region15: #{_lambda_.2} parent=11 // pred_region
        _
      $region16: #{_lambda_.2} parent=11 // pred_fallthru
        _
      // Predicated region
      $region17: #{_lambda_.2} parent=11 // pred_check
        %p159 = pneg %p92
      $region18: #{_lambda_.2} parent=11 // pred_check_branch
        %161 = sbr.rel (%p159) target = $region20
      $region19: #{_lambda_.2} parent=11 // pred_region
        _
      $region20: #{_lambda_.2} parent=11 // pred_fallthru
        _
      // Predicated region
      $region21: #{_lambda_.2} parent=11 // pred_check
        %p162 = pneg %p113
      $region22: #{_lambda_.2} parent=11 // pred_check_branch
        %164 = sbr.rel (%p162) target = $region24
      $region23: #{_lambda_.2} parent=11 // pred_region
        _
      $region24: #{_lambda_.2} parent=11 // pred_fallthru
        _
    $region12: #{_lambda_.2} parent=5 // pred_fallthru
      _
    %p165 = scmp.lt.s32.totalorder %s10, 2
    // Predicated region
    $region25: #{_lambda_.2} parent=5 // pred_check
      %p166 = pneg %p165
    $region26: #{_lambda_.2} parent=5 // pred_check_branch
      %168 = sbr.rel (%p166) target = $region28
    $region27: #{_lambda_.2} parent=5 // pred_region
      // Predicated region
      $region29: #{_lambda_.2} parent=27 // pred_check
        %p169 = pneg %p44
      $region30: #{_lambda_.2} parent=27 // pred_check_branch
        %171 = sbr.rel (%p169) target = $region32
      $region31: #{_lambda_.2} parent=27 // pred_region
        %s172 = smul.u32 2, %s18
        %p173 = scmp.lt.s32.totalorder %s17, 1
        %s174 = scalar_select %p173, %s17, 1
        %p175 = scmp.lt.s32.totalorder %s172, 1
        %s176 = scalar_select %p175, %s172, 1
        %s177 = smul.addr %s174, 2
        %s178 = sadd.s32 %s176, %s177
        %s179 = smul.addr %s178, 8
        %s180 = scalar_lea.vmem %s0, %s179
        %s181 = smul.u32 2, %s18
      $region32: #{_lambda_.2} parent=27 // pred_fallthru
        _
    $region28: #{_lambda_.2} parent=5 // pred_fallthru
      _
    %p182 = scmp.le.s32.totalorder 1, %s10
    %p183 = scmp.lt.s32.totalorder %s10, 3
    %p184 = pnand %p182, %p183
    %p185 = pneg %p184
    // Predicated region
    $region33: #{_lambda_.2} parent=5 // pred_check
      _
    $region34: #{_lambda_.2} parent=5 // pred_check_branch
      %187 = sbr.rel (%p184) target = $region36
    $region35: #{_lambda_.2} parent=5 // pred_region
      %s188 = ssub.s32 %s10, 1
      %s189 = smul.u32 2, %s20
      %p190 = scmp.lt.s32.totalorder %s19, 1
      %s191 = scalar_select %p190, %s19, 1
      %p192 = scmp.lt.s32.totalorder %s189, 1
      %s193 = scalar_select %p192, %s189, 1
      %s194 = smul.addr %s191, 2
      %s195 = sadd.s32 %s193, %s194
      %s196 = smul.addr %s195, 8
      %s197 = scalar_lea.vmem %s0, %s196
      %p198 = pneg %p50
      %p199 = pneg %p47
      %p200 = pneg %p71
      %p201 = pneg %p68
      %p202 = pneg %p92
      %p203 = pneg %p89
      %p204 = pneg %p113
      %p205 = pneg %p110
      %p206 = pneg %p141
      %p207 = pneg %p138
      %s208 = smul.u32 2, %s20
      %p209 = scmp.lt.s32.totalorder %s19, 1
      %s210 = scalar_select %p209, %s19, 1
      %p211 = scmp.lt.s32.totalorder %s208, 1
      %s212 = scalar_select %p211, %s208, 1
      %s213 = smul.addr %s210, 8
      %s214 = sadd.s32 %s212, %s213
      %s215 = smul.addr %s214, 8
      %s216 = scalar_lea.vmem %s4, %s215
      %s217 = smul.u32 2, %s20
      %p218 = scmp.lt.s32.totalorder %s19, 1
      %s219 = scalar_select %p218, %s19, 1
      %p220 = scmp.lt.s32.totalorder %s217, 1
      %s221 = scalar_select %p220, %s217, 1
      %s222 = smul.addr %s219, 2
      %s223 = sadd.s32 %s221, %s222
      %s224 = smul.addr %s223, 8
      %s225 = scalar_lea.vmem %s0, %s224
      %s226 = smul.u32 2, %s20
      %s227 = smul.u32 2, %s20
      %p228 = scmp.lt.s32.totalorder %s19, 1
      %s229 = scalar_select %p228, %s19, 1
      %p230 = scmp.lt.s32.totalorder %s227, 1
      %s231 = scalar_select %p230, %s227, 1
      %s232 = smul.addr %s229, 8
      %s233 = sadd.s32 %s231, %s232
      %s234 = smul.addr %s233, 8
      %s235 = scalar_lea.vmem %s4, %s234
      %s236 = smul.u32 2, %s20
      %v237 = vld [vmem:[%s225] sm:$0xff]
      %v238 = vld [vmem:[%s225 + $0x8] sm:$0xff]
      %v239 = vld [vmem:[%s1] sm:$0xf]
      %vm240 = vcmask 31744
      %v242 = vsel %vm240, %v237, 0
      %v245 = vsel %vm240, %v238, 0
      %vm247 = vcmask 1043456
      %v249 = vsel %vm247, %v239, 0
      %251 = vmatprep.subr.mxu0 0.0
      %252 = vmatpush1.msra.mxu0 %v249
      %253 = vmatprep.subr.mxu0 0.0
      %254 = vmatpush1.msra.mxu0 0.0
      %255 = vmatprep.subr.mxu0 0.0
      %256 = vmatpush1.msra.mxu0 0.0
      %257 = vmatprep.subr.mxu0 0.0
      %258 = vmatpush1.msra.mxu0 0.0
      %259 = vmatprep.subr.mxu0 0.0
      %260 = vmatpush1.msra.mxu0 0.0
      %261 = vmatprep.subr.mxu0 0.0
      %262 = vmatpush1.msra.mxu0 0.0
      %263 = vmatprep.subr.mxu0 0.0
      %264 = vmatpush1.msra.mxu0 0.0
      %265 = vmatprep.subr.mxu0 0.0
      %266 = vmatpush1.msra.mxu0 0.0
      %267 = vmatprep.subr.mxu0 0.0
      %268 = vmatpush1.msra.mxu0 0.0
      %269 = vmatprep.subr.mxu0 0.0
      %270 = vmatpush1.msra.mxu0 0.0
      %271 = vmatprep.subr.mxu0 0.0
      %272 = vmatpush1.msra.mxu0 0.0
      %273 = vmatprep.subr.mxu0 0.0
      %274 = vmatpush1.msra.mxu0 0.0
      %275 = vmatprep.subr.mxu0 0.0
      %276 = vmatpush1.msra.mxu0 0.0
      %277 = vmatprep.subr.mxu0 0.0
      %278 = vmatpush1.msra.mxu0 0.0
      %279 = vmatprep.subr.mxu0 0.0
      %280 = vmatpush1.msra.mxu0 0.0
      %281 = vmatprep.subr.mxu0 0.0
      %282 = vmatpush1.msra.mxu0 0.0
      %283 = vmatprep.subr.mxu0 0.0
      %284 = vmatpush1.msra.mxu0 0.0
      %285 = vmatprep.subr.mxu0 0.0
      %286 = vmatpush1.msra.mxu0 0.0
      %287 = vmatprep.subr.mxu0 0.0
      %288 = vmatpush1.msra.mxu0 0.0
      %289 = vmatprep.subr.mxu0 0.0
      %290 = vmatpush1.msra.mxu0 0.0
      %291 = vmatprep.subr.mxu0 0.0
      %292 = vmatpush1.msra.mxu0 0.0
      %293 = vmatprep.subr.mxu0 0.0
      %294 = vmatpush1.msra.mxu0 0.0
      %295 = vmatprep.subr.mxu0 0.0
      %296 = vmatpush1.msra.mxu0 0.0
      %297 = vmatprep.subr.mxu0 0.0
      %298 = vmatpush1.msra.mxu0 0.0
      %299 = vmatprep.subr.mxu0 0.0
      %300 = vmatpush1.msra.mxu0 0.0
      %301 = vmatprep.subr.mxu0 0.0
      %302 = vmatpush1.msra.mxu0 0.0
      %303 = vmatprep.subr.mxu0 0.0
      %304 = vmatpush1.msra.mxu0 0.0
      %305 = vmatprep.subr.mxu0 0.0
      %306 = vmatpush1.msra.mxu0 0.0
      %307 = vmatprep.subr.mxu0 0.0
      %308 = vmatpush1.msra.mxu0 0.0
      %309 = vmatprep.subr.mxu0 0.0
      %310 = vmatpush1.msra.mxu0 0.0
      %311 = vmatprep.subr.mxu0 0.0
      %312 = vmatpush1.msra.mxu0 0.0
      %313 = vmatprep.subr.mxu0 0.0
      %314 = vmatpush1.msra.mxu0 0.0
      %315 = vmatprep.mubr.f32.mxu0 0.0
      %316 = vmatmul.mubr.f32.gmra.mrb[0].mxu0 %v242
      %v317 = vpop.f32.mrb[0].mxu0
      %v318 = vadd.f32 0.0, %v317
      %v319 = vpop.f32.mrb[0].mxu0
      %320 = vmatprep.mubr.f32.mxu0 0.0
      %321 = vmatmul.mubr.f32.gmra.mrb[0].mxu0 %v245
      %v322 = vpop.f32.mrb[0].mxu0
      %v323 = vadd.f32 0.0, %v322
      %v324 = vpop.f32.mrb[0].mxu0
      %325 = vdwg.mxu0
      %v326 = vld [vmem:[%s2] sm:$0xff]
      %vm327 = vcmask 64512
      %v329 = vsel %vm327, %v318, 0
      %v332 = vsel %vm327, %v323, 0
      %334 = vmatprep.subr.mxu0 0.0
      %335 = vmatpush1.msra.mxu0 %v326
      %336 = vmatprep.subr.mxu0 0.0
      %337 = vmatpush1.msra.mxu0 0.0
      %338 = vmatprep.subr.mxu0 0.0
      %339 = vmatpush1.msra.mxu0 0.0
      %340 = vmatprep.subr.mxu0 0.0
      %341 = vmatpush1.msra.mxu0 0.0
      %342 = vmatprep.subr.mxu0 0.0
      %343 = vmatpush1.msra.mxu0 0.0
      %344 = vmatprep.subr.mxu0 0.0
      %345 = vmatpush1.msra.mxu0 0.0
      %346 = vmatprep.subr.mxu0 0.0
      %347 = vmatpush1.msra.mxu0 0.0
      %348 = vmatprep.subr.mxu0 0.0
      %349 = vmatpush1.msra.mxu0 0.0
      %350 = vmatprep.subr.mxu0 0.0
      %351 = vmatpush1.msra.mxu0 0.0
      %352 = vmatprep.subr.mxu0 0.0
      %353 = vmatpush1.msra.mxu0 0.0
      %354 = vmatprep.subr.mxu0 0.0
      %355 = vmatpush1.msra.mxu0 0.0
      %356 = vmatprep.subr.mxu0 0.0
      %357 = vmatpush1.msra.mxu0 0.0
      %358 = vmatprep.subr.mxu0 0.0
      %359 = vmatpush1.msra.mxu0 0.0
      %360 = vmatprep.subr.mxu0 0.0
      %361 = vmatpush1.msra.mxu0 0.0
      %362 = vmatprep.subr.mxu0 0.0
      %363 = vmatpush1.msra.mxu0 0.0
      %364 = vmatprep.subr.mxu0 0.0
      %365 = vmatpush1.msra.mxu0 0.0
      %366 = vmatprep.subr.mxu0 0.0
      %367 = vmatpush1.msra.mxu0 0.0
      %368 = vmatprep.subr.mxu0 0.0
      %369 = vmatpush1.msra.mxu0 0.0
      %370 = vmatprep.subr.mxu0 0.0
      %371 = vmatpush1.msra.mxu0 0.0
      %372 = vmatprep.subr.mxu0 0.0
      %373 = vmatpush1.msra.mxu0 0.0
      %374 = vmatprep.subr.mxu0 0.0
      %375 = vmatpush1.msra.mxu0 0.0
      %376 = vmatprep.subr.mxu0 0.0
      %377 = vmatpush1.msra.mxu0 0.0
      %378 = vmatprep.subr.mxu0 0.0
      %379 = vmatpush1.msra.mxu0 0.0
      %380 = vmatprep.subr.mxu0 0.0
      %381 = vmatpush1.msra.mxu0 0.0
      %382 = vmatprep.subr.mxu0 0.0
      %383 = vmatpush1.msra.mxu0 0.0
      %384 = vmatprep.subr.mxu0 0.0
      %385 = vmatpush1.msra.mxu0 0.0
      %386 = vmatprep.subr.mxu0 0.0
      %387 = vmatpush1.msra.mxu0 0.0
      %388 = vmatprep.subr.mxu0 0.0
      %389 = vmatpush1.msra.mxu0 0.0
      %390 = vmatprep.subr.mxu0 0.0
      %391 = vmatpush1.msra.mxu0 0.0
      %392 = vmatprep.subr.mxu0 0.0
      %393 = vmatpush1.msra.mxu0 0.0
      %394 = vmatprep.subr.mxu0 0.0
      %395 = vmatpush1.msra.mxu0 0.0
      %396 = vmatprep.subr.mxu0 0.0
      %397 = vmatpush1.msra.mxu0 0.0
      %398 = vmatprep.mubr.f32.mxu0 0.0
      %399 = vmatmul.mubr.f32.gmra.mrb[0].mxu0 %v329
      %v400 = vpop.f32.mrb[0].mxu0
      %v401 = vadd.f32 0.0, %v400
      %v402 = vpop.f32.mrb[0].mxu0
      %403 = vmatprep.mubr.f32.mxu0 0.0
      %404 = vmatmul.mubr.f32.gmra.mrb[0].mxu0 %v332
      %v405 = vpop.f32.mrb[0].mxu0
      %v406 = vadd.f32 0.0, %v405
      %v407 = vpop.f32.mrb[0].mxu0
      %408 = vdwg.mxu0
      %v409 = vld [vmem:[%s3] sm:$0xff]
      %410 = vmatprep.subr.mxu0 0.0
      %411 = vmatpush1.msra.mxu0 %v409
      %412 = vmatprep.subr.mxu0 0.0
      %413 = vmatpush1.msra.mxu0 0.0
      %414 = vmatprep.subr.mxu0 0.0
      %415 = vmatpush1.msra.mxu0 0.0
      %416 = vmatprep.subr.mxu0 0.0
      %417 = vmatpush1.msra.mxu0 0.0
      %418 = vmatprep.subr.mxu0 0.0
      %419 = vmatpush1.msra.mxu0 0.0
      %420 = vmatprep.subr.mxu0 0.0
      %421 = vmatpush1.msra.mxu0 0.0
      %422 = vmatprep.subr.mxu0 0.0
      %423 = vmatpush1.msra.mxu0 0.0
      %424 = vmatprep.subr.mxu0 0.0
      %425 = vmatpush1.msra.mxu0 0.0
      %426 = vmatprep.subr.mxu0 0.0
      %427 = vmatpush1.msra.mxu0 0.0
      %428 = vmatprep.subr.mxu0 0.0
      %429 = vmatpush1.msra.mxu0 0.0
      %430 = vmatprep.subr.mxu0 0.0
      %431 = vmatpush1.msra.mxu0 0.0
      %432 = vmatprep.subr.mxu0 0.0
      %433 = vmatpush1.msra.mxu0 0.0
      %434 = vmatprep.subr.mxu0 0.0
      %435 = vmatpush1.msra.mxu0 0.0
      %436 = vmatprep.subr.mxu0 0.0
      %437 = vmatpush1.msra.mxu0 0.0
      %438 = vmatprep.subr.mxu0 0.0
      %439 = vmatpush1.msra.mxu0 0.0
      %440 = vmatprep.subr.mxu0 0.0
      %441 = vmatpush1.msra.mxu0 0.0
      %442 = vmatprep.subr.mxu0 0.0
      %443 = vmatpush1.msra.mxu0 0.0
      %444 = vmatprep.subr.mxu0 0.0
      %445 = vmatpush1.msra.mxu0 0.0
      %446 = vmatprep.subr.mxu0 0.0
      %447 = vmatpush1.msra.mxu0 0.0
      %448 = vmatprep.subr.mxu0 0.0
      %449 = vmatpush1.msra.mxu0 0.0
      %450 = vmatprep.subr.mxu0 0.0
      %451 = vmatpush1.msra.mxu0 0.0
      %452 = vmatprep.subr.mxu0 0.0
      %453 = vmatpush1.msra.mxu0 0.0
      %454 = vmatprep.subr.mxu0 0.0
      %455 = vmatpush1.msra.mxu0 0.0
      %456 = vmatprep.subr.mxu0 0.0
      %457 = vmatpush1.msra.mxu0 0.0
      %458 = vmatprep.subr.mxu0 0.0
      %459 = vmatpush1.msra.mxu0 0.0
      %460 = vmatprep.subr.mxu0 0.0
      %461 = vmatpush1.msra.mxu0 0.0
      %462 = vmatprep.subr.mxu0 0.0
      %463 = vmatpush1.msra.mxu0 0.0
      %464 = vmatprep.subr.mxu0 0.0
      %465 = vmatpush1.msra.mxu0 0.0
      %466 = vmatprep.subr.mxu0 0.0
      %467 = vmatpush1.msra.mxu0 0.0
      %468 = vmatprep.subr.mxu0 0.0
      %469 = vmatpush1.msra.mxu0 0.0
      %470 = vmatprep.subr.mxu0 0.0
      %471 = vmatpush1.msra.mxu0 0.0
      %472 = vmatprep.subr.mxu0 0.0
      %473 = vmatpush1.msra.mxu0 0.0
      %474 = vmatprep.mubr.f32.mxu0 0.0
      %475 = vmatmul.mubr.f32.gmra.mrb[0].mxu0 %v329
      %v476 = vpop.f32.mrb[0].mxu0
      %v477 = vadd.f32 0.0, %v476
      %v478 = vpop.f32.mrb[0].mxu0
      %479 = vmatprep.mubr.f32.mxu0 0.0
      %480 = vmatmul.mubr.f32.gmra.mrb[0].mxu0 %v332
      %v481 = vpop.f32.mrb[0].mxu0
      %v482 = vadd.f32 0.0, %v481
      %v483 = vpop.f32.mrb[0].mxu0
      %484 = vdwg.mxu0
      %487 = vrot.lane.b32.xlu0 %v401, 8
      %v488 = vpop.permute.xlu0 %487
      %489 = vrot.lane.b32.xlu0 %v406, 8
      %v490 = vpop.permute.xlu0 %489
      %495 = vrot.lane.b32.xlu0 %v477, 16
      %v496 = vpop.permute.xlu0 %495
      %497 = vrot.lane.b32.xlu0 %v482, 16
      %v498 = vpop.permute.xlu0 %497
      %v501 = vsel %vm327, %v318, %v488
      %v502 = vsel %vm327, %v323, %v490
      %vm503 = vcmask 130048
      %v504 = vsel %vm503, %v501, %v496
      %v505 = vsel %vm503, %v502, %v498
      %vm506 = vcmask 195584
      %507 = vst.msk [vmem:[%s235] sm:$0xff] %vm506, %v504
      %508 = vst.msk [vmem:[%s235 + $0x8] sm:$0xff] %vm506, %v505
      %s509 = scalar_lea.vmem %s2, 8
      %v510 = vld [vmem:[%s509] sm:$0xff]
      %511 = vrot.lane.b32.xlu0 %v318, 120
      %v512 = vpop.permute.xlu0 %511
      %513 = vrot.lane.b32.xlu0 %v323, 120
      %v514 = vpop.permute.xlu0 %513
      %v515 = vsel %vm327, %v512, 0
      %v517 = vsel %vm327, %v514, 0
      %519 = vmatprep.subr.mxu0 0.0
      %520 = vmatpush1.msra.mxu0 %v510
      %521 = vmatprep.subr.mxu0 0.0
      %522 = vmatpush1.msra.mxu0 0.0
      %523 = vmatprep.subr.mxu0 0.0
      %524 = vmatpush1.msra.mxu0 0.0
      %525 = vmatprep.subr.mxu0 0.0
      %526 = vmatpush1.msra.mxu0 0.0
      %527 = vmatprep.subr.mxu0 0.0
      %528 = vmatpush1.msra.mxu0 0.0
      %529 = vmatprep.subr.mxu0 0.0
      %530 = vmatpush1.msra.mxu0 0.0
      %531 = vmatprep.subr.mxu0 0.0
      %532 = vmatpush1.msra.mxu0 0.0
      %533 = vmatprep.subr.mxu0 0.0
      %534 = vmatpush1.msra.mxu0 0.0
      %535 = vmatprep.subr.mxu0 0.0
      %536 = vmatpush1.msra.mxu0 0.0
      %537 = vmatprep.subr.mxu0 0.0
      %538 = vmatpush1.msra.mxu0 0.0
      %539 = vmatprep.subr.mxu0 0.0
      %540 = vmatpush1.msra.mxu0 0.0
      %541 = vmatprep.subr.mxu0 0.0
      %542 = vmatpush1.msra.mxu0 0.0
      %543 = vmatprep.subr.mxu0 0.0
      %544 = vmatpush1.msra.mxu0 0.0
      %545 = vmatprep.subr.mxu0 0.0
      %546 = vmatpush1.msra.mxu0 0.0
      %547 = vmatprep.subr.mxu0 0.0
      %548 = vmatpush1.msra.mxu0 0.0
      %549 = vmatprep.subr.mxu0 0.0
      %550 = vmatpush1.msra.mxu0 0.0
      %551 = vmatprep.subr.mxu0 0.0
      %552 = vmatpush1.msra.mxu0 0.0
      %553 = vmatprep.subr.mxu0 0.0
      %554 = vmatpush1.msra.mxu0 0.0
      %555 = vmatprep.subr.mxu0 0.0
      %556 = vmatpush1.msra.mxu0 0.0
      %557 = vmatprep.subr.mxu0 0.0
      %558 = vmatpush1.msra.mxu0 0.0
      %559 = vmatprep.subr.mxu0 0.0
      %560 = vmatpush1.msra.mxu0 0.0
      %561 = vmatprep.subr.mxu0 0.0
      %562 = vmatpush1.msra.mxu0 0.0
      %563 = vmatprep.subr.mxu0 0.0
      %564 = vmatpush1.msra.mxu0 0.0
      %565 = vmatprep.subr.mxu0 0.0
      %566 = vmatpush1.msra.mxu0 0.0
      %567 = vmatprep.subr.mxu0 0.0
      %568 = vmatpush1.msra.mxu0 0.0
      %569 = vmatprep.subr.mxu0 0.0
      %570 = vmatpush1.msra.mxu0 0.0
      %571 = vmatprep.subr.mxu0 0.0
      %572 = vmatpush1.msra.mxu0 0.0
      %573 = vmatprep.subr.mxu0 0.0
      %574 = vmatpush1.msra.mxu0 0.0
      %575 = vmatprep.subr.mxu0 0.0
      %576 = vmatpush1.msra.mxu0 0.0
      %577 = vmatprep.subr.mxu0 0.0
      %578 = vmatpush1.msra.mxu0 0.0
      %579 = vmatprep.subr.mxu0 0.0
      %580 = vmatpush1.msra.mxu0 0.0
      %581 = vmatprep.subr.mxu0 0.0
      %582 = vmatpush1.msra.mxu0 0.0
      %583 = vmatprep.mubr.f32.mxu0 0.0
      %584 = vmatmul.mubr.f32.gmra.mrb[0].mxu0 %v515
      %v585 = vpop.f32.mrb[0].mxu0
      %v586 = vadd.f32 0.0, %v585
      %v587 = vpop.f32.mrb[0].mxu0
      %588 = vmatprep.mubr.f32.mxu0 0.0
      %589 = vmatmul.mubr.f32.gmra.mrb[0].mxu0 %v517
      %v590 = vpop.f32.mrb[0].mxu0
      %v591 = vadd.f32 0.0, %v590
      %v592 = vpop.f32.mrb[0].mxu0
      %593 = vdwg.mxu0
      %s594 = scalar_lea.vmem %s3, 8
      %v595 = vld [vmem:[%s594] sm:$0xff]
      %596 = vmatprep.subr.mxu0 0.0
      %597 = vmatpush1.msra.mxu0 %v595
      %598 = vmatprep.subr.mxu0 0.0
      %599 = vmatpush1.msra.mxu0 0.0
      %600 = vmatprep.subr.mxu0 0.0
      %601 = vmatpush1.msra.mxu0 0.0
      %602 = vmatprep.subr.mxu0 0.0
      %603 = vmatpush1.msra.mxu0 0.0
      %604 = vmatprep.subr.mxu0 0.0
      %605 = vmatpush1.msra.mxu0 0.0
      %606 = vmatprep.subr.mxu0 0.0
      %607 = vmatpush1.msra.mxu0 0.0
      %608 = vmatprep.subr.mxu0 0.0
      %609 = vmatpush1.msra.mxu0 0.0
      %610 = vmatprep.subr.mxu0 0.0
      %611 = vmatpush1.msra.mxu0 0.0
      %612 = vmatprep.subr.mxu0 0.0
      %613 = vmatpush1.msra.mxu0 0.0
      %614 = vmatprep.subr.mxu0 0.0
      %615 = vmatpush1.msra.mxu0 0.0
      %616 = vmatprep.subr.mxu0 0.0
      %617 = vmatpush1.msra.mxu0 0.0
      %618 = vmatprep.subr.mxu0 0.0
      %619 = vmatpush1.msra.mxu0 0.0
      %620 = vmatprep.subr.mxu0 0.0
      %621 = vmatpush1.msra.mxu0 0.0
      %622 = vmatprep.subr.mxu0 0.0
      %623 = vmatpush1.msra.mxu0 0.0
      %624 = vmatprep.subr.mxu0 0.0
      %625 = vmatpush1.msra.mxu0 0.0
      %626 = vmatprep.subr.mxu0 0.0
      %627 = vmatpush1.msra.mxu0 0.0
      %628 = vmatprep.subr.mxu0 0.0
      %629 = vmatpush1.msra.mxu0 0.0
      %630 = vmatprep.subr.mxu0 0.0
      %631 = vmatpush1.msra.mxu0 0.0
      %632 = vmatprep.subr.mxu0 0.0
      %633 = vmatpush1.msra.mxu0 0.0
      %634 = vmatprep.subr.mxu0 0.0
      %635 = vmatpush1.msra.mxu0 0.0
      %636 = vmatprep.subr.mxu0 0.0
      %637 = vmatpush1.msra.mxu0 0.0
      %638 = vmatprep.subr.mxu0 0.0
      %639 = vmatpush1.msra.mxu0 0.0
      %640 = vmatprep.subr.mxu0 0.0
      %641 = vmatpush1.msra.mxu0 0.0
      %642 = vmatprep.subr.mxu0 0.0
      %643 = vmatpush1.msra.mxu0 0.0
      %644 = vmatprep.subr.mxu0 0.0
      %645 = vmatpush1.msra.mxu0 0.0
      %646 = vmatprep.subr.mxu0 0.0
      %647 = vmatpush1.msra.mxu0 0.0
      %648 = vmatprep.subr.mxu0 0.0
      %649 = vmatpush1.msra.mxu0 0.0
      %650 = vmatprep.subr.mxu0 0.0
      %651 = vmatpush1.msra.mxu0 0.0
      %652 = vmatprep.subr.mxu0 0.0
      %653 = vmatpush1.msra.mxu0 0.0
      %654 = vmatprep.subr.mxu0 0.0
      %655 = vmatpush1.msra.mxu0 0.0
      %656 = vmatprep.subr.mxu0 0.0
      %657 = vmatpush1.msra.mxu0 0.0
      %658 = vmatprep.subr.mxu0 0.0
      %659 = vmatpush1.msra.mxu0 0.0
      %660 = vmatprep.mubr.f32.mxu0 0.0
      %661 = vmatmul.mubr.f32.gmra.mrb[0].mxu0 %v515
      %v662 = vpop.f32.mrb[0].mxu0
      %v663 = vadd.f32 0.0, %v662
      %v664 = vpop.f32.mrb[0].mxu0
      %665 = vmatprep.mubr.f32.mxu0 0.0
      %666 = vmatmul.mubr.f32.gmra.mrb[0].mxu0 %v517
      %v667 = vpop.f32.mrb[0].mxu0
      %v668 = vadd.f32 0.0, %v667
      %v669 = vpop.f32.mrb[0].mxu0
      %670 = vdwg.mxu0
      %675 = vrot.lane.b32.xlu0 %v586, 8
      %v676 = vpop.permute.xlu0 %675
      %677 = vrot.lane.b32.xlu0 %v591, 8
      %v678 = vpop.permute.xlu0 %677
      %683 = vrot.lane.b32.xlu0 %v663, 16
      %v684 = vpop.permute.xlu0 %683
      %685 = vrot.lane.b32.xlu0 %v668, 16
      %v686 = vpop.permute.xlu0 %685
      %v689 = vsel %vm327, %v512, %v676
      %v690 = vsel %vm327, %v514, %v678
      %v691 = vsel %vm503, %v689, %v684
      %v692 = vsel %vm503, %v690, %v686
      %s693 = scalar_lea.vmem %s235, 16
      %694 = vst.msk [vmem:[%s693] sm:$0xff] %vm506, %v691
      %695 = vst.msk [vmem:[%s693 + $0x8] sm:$0xff] %vm506, %v692
      %s696 = scalar_lea.vmem %s2, 16
      %v697 = vld [vmem:[%s696] sm:$0xff]
      %698 = vrot.lane.b32.xlu0 %v318, 112
      %v699 = vpop.permute.xlu0 %698
      %700 = vrot.lane.b32.xlu0 %v323, 112
      %v701 = vpop.permute.xlu0 %700
      %v702 = vsel %vm327, %v699, 0
      %v704 = vsel %vm327, %v701, 0
      %706 = vmatprep.subr.mxu0 0.0
      %707 = vmatpush1.msra.mxu0 %v697
      %708 = vmatprep.subr.mxu0 0.0
      %709 = vmatpush1.msra.mxu0 0.0
      %710 = vmatprep.subr.mxu0 0.0
      %711 = vmatpush1.msra.mxu0 0.0
      %712 = vmatprep.subr.mxu0 0.0
      %713 = vmatpush1.msra.mxu0 0.0
      %714 = vmatprep.subr.mxu0 0.0
      %715 = vmatpush1.msra.mxu0 0.0
      %716 = vmatprep.subr.mxu0 0.0
      %717 = vmatpush1.msra.mxu0 0.0
      %718 = vmatprep.subr.mxu0 0.0
      %719 = vmatpush1.msra.mxu0 0.0
      %720 = vmatprep.subr.mxu0 0.0
      %721 = vmatpush1.msra.mxu0 0.0
      %722 = vmatprep.subr.mxu0 0.0
      %723 = vmatpush1.msra.mxu0 0.0
      %724 = vmatprep.subr.mxu0 0.0
      %725 = vmatpush1.msra.mxu0 0.0
      %726 = vmatprep.subr.mxu0 0.0
      %727 = vmatpush1.msra.mxu0 0.0
      %728 = vmatprep.subr.mxu0 0.0
      %729 = vmatpush1.msra.mxu0 0.0
      %730 = vmatprep.subr.mxu0 0.0
      %731 = vmatpush1.msra.mxu0 0.0
      %732 = vmatprep.subr.mxu0 0.0
      %733 = vmatpush1.msra.mxu0 0.0
      %734 = vmatprep.subr.mxu0 0.0
      %735 = vmatpush1.msra.mxu0 0.0
      %736 = vmatprep.subr.mxu0 0.0
      %737 = vmatpush1.msra.mxu0 0.0
      %738 = vmatprep.subr.mxu0 0.0
      %739 = vmatpush1.msra.mxu0 0.0
      %740 = vmatprep.subr.mxu0 0.0
      %741 = vmatpush1.msra.mxu0 0.0
      %742 = vmatprep.subr.mxu0 0.0
      %743 = vmatpush1.msra.mxu0 0.0
      %744 = vmatprep.subr.mxu0 0.0
      %745 = vmatpush1.msra.mxu0 0.0
      %746 = vmatprep.subr.mxu0 0.0
      %747 = vmatpush1.msra.mxu0 0.0
      %748 = vmatprep.subr.mxu0 0.0
      %749 = vmatpush1.msra.mxu0 0.0
      %750 = vmatprep.subr.mxu0 0.0
      %751 = vmatpush1.msra.mxu0 0.0
      %752 = vmatprep.subr.mxu0 0.0
      %753 = vmatpush1.msra.mxu0 0.0
      %754 = vmatprep.subr.mxu0 0.0
      %755 = vmatpush1.msra.mxu0 0.0
      %756 = vmatprep.subr.mxu0 0.0
      %757 = vmatpush1.msra.mxu0 0.0
      %758 = vmatprep.subr.mxu0 0.0
      %759 = vmatpush1.msra.mxu0 0.0
      %760 = vmatprep.subr.mxu0 0.0
      %761 = vmatpush1.msra.mxu0 0.0
      %762 = vmatprep.subr.mxu0 0.0
      %763 = vmatpush1.msra.mxu0 0.0
      %764 = vmatprep.subr.mxu0 0.0
      %765 = vmatpush1.msra.mxu0 0.0
      %766 = vmatprep.subr.mxu0 0.0
      %767 = vmatpush1.msra.mxu0 0.0
      %768 = vmatprep.subr.mxu0 0.0
      %769 = vmatpush1.msra.mxu0 0.0
      %770 = vmatprep.mubr.f32.mxu0 0.0
      %771 = vmatmul.mubr.f32.gmra.mrb[0].mxu0 %v702
      %v772 = vpop.f32.mrb[0].mxu0
      %v773 = vadd.f32 0.0, %v772
      %v774 = vpop.f32.mrb[0].mxu0
      %775 = vmatprep.mubr.f32.mxu0 0.0
      %776 = vmatmul.mubr.f32.gmra.mrb[0].mxu0 %v704
      %v777 = vpop.f32.mrb[0].mxu0
      %v778 = vadd.f32 0.0, %v777
      %v779 = vpop.f32.mrb[0].mxu0
      %780 = vdwg.mxu0
      %s781 = scalar_lea.vmem %s3, 16
      %v782 = vld [vmem:[%s781] sm:$0xff]
      %783 = vmatprep.subr.mxu0 0.0
      %784 = vmatpush1.msra.mxu0 %v782
      %785 = vmatprep.subr.mxu0 0.0
      %786 = vmatpush1.msra.mxu0 0.0
      %787 = vmatprep.subr.mxu0 0.0
      %788 = vmatpush1.msra.mxu0 0.0
      %789 = vmatprep.subr.mxu0 0.0
      %790 = vmatpush1.msra.mxu0 0.0
      %791 = vmatprep.subr.mxu0 0.0
      %792 = vmatpush1.msra.mxu0 0.0
      %793 = vmatprep.subr.mxu0 0.0
      %794 = vmatpush1.msra.mxu0 0.0
      %795 = vmatprep.subr.mxu0 0.0
      %796 = vmatpush1.msra.mxu0 0.0
      %797 = vmatprep.subr.mxu0 0.0
      %798 = vmatpush1.msra.mxu0 0.0
      %799 = vmatprep.subr.mxu0 0.0
      %800 = vmatpush1.msra.mxu0 0.0
      %801 = vmatprep.subr.mxu0 0.0
      %802 = vmatpush1.msra.mxu0 0.0
      %803 = vmatprep.subr.mxu0 0.0
      %804 = vmatpush1.msra.mxu0 0.0
      %805 = vmatprep.subr.mxu0 0.0
      %806 = vmatpush1.msra.mxu0 0.0
      %807 = vmatprep.subr.mxu0 0.0
      %808 = vmatpush1.msra.mxu0 0.0
      %809 = vmatprep.subr.mxu0 0.0
      %810 = vmatpush1.msra.mxu0 0.0
      %811 = vmatprep.subr.mxu0 0.0
      %812 = vmatpush1.msra.mxu0 0.0
      %813 = vmatprep.subr.mxu0 0.0
      %814 = vmatpush1.msra.mxu0 0.0
      %815 = vmatprep.subr.mxu0 0.0
      %816 = vmatpush1.msra.mxu0 0.0
      %817 = vmatprep.subr.mxu0 0.0
      %818 = vmatpush1.msra.mxu0 0.0
      %819 = vmatprep.subr.mxu0 0.0
      %820 = vmatpush1.msra.mxu0 0.0
      %821 = vmatprep.subr.mxu0 0.0
      %822 = vmatpush1.msra.mxu0 0.0
      %823 = vmatprep.subr.mxu0 0.0
      %824 = vmatpush1.msra.mxu0 0.0
      %825 = vmatprep.subr.mxu0 0.0
      %826 = vmatpush1.msra.mxu0 0.0
      %827 = vmatprep.subr.mxu0 0.0
      %828 = vmatpush1.msra.mxu0 0.0
      %829 = vmatprep.subr.mxu0 0.0
      %830 = vmatpush1.msra.mxu0 0.0
      %831 = vmatprep.subr.mxu0 0.0
      %832 = vmatpush1.msra.mxu0 0.0
      %833 = vmatprep.subr.mxu0 0.0
      %834 = vmatpush1.msra.mxu0 0.0
      %835 = vmatprep.subr.mxu0 0.0
      %836 = vmatpush1.msra.mxu0 0.0
      %837 = vmatprep.subr.mxu0 0.0
      %838 = vmatpush1.msra.mxu0 0.0
      %839 = vmatprep.subr.mxu0 0.0
      %840 = vmatpush1.msra.mxu0 0.0
      %841 = vmatprep.subr.mxu0 0.0
      %842 = vmatpush1.msra.mxu0 0.0
      %843 = vmatprep.subr.mxu0 0.0
      %844 = vmatpush1.msra.mxu0 0.0
      %845 = vmatprep.subr.mxu0 0.0
      %846 = vmatpush1.msra.mxu0 0.0
      %847 = vmatprep.mubr.f32.mxu0 0.0
      %848 = vmatmul.mubr.f32.gmra.mrb[0].mxu0 %v702
      %v849 = vpop.f32.mrb[0].mxu0
      %v850 = vadd.f32 0.0, %v849
      %v851 = vpop.f32.mrb[0].mxu0
      %852 = vmatprep.mubr.f32.mxu0 0.0
      %853 = vmatmul.mubr.f32.gmra.mrb[0].mxu0 %v704
      %v854 = vpop.f32.mrb[0].mxu0
      %v855 = vadd.f32 0.0, %v854
      %v856 = vpop.f32.mrb[0].mxu0
      %857 = vdwg.mxu0
      %862 = vrot.lane.b32.xlu0 %v773, 8
      %v863 = vpop.permute.xlu0 %862
      %864 = vrot.lane.b32.xlu0 %v778, 8
      %v865 = vpop.permute.xlu0 %864
      %870 = vrot.lane.b32.xlu0 %v850, 16
      %v871 = vpop.permute.xlu0 %870
      %872 = vrot.lane.b32.xlu0 %v855, 16
      %v873 = vpop.permute.xlu0 %872
      %v876 = vsel %vm327, %v699, %v863
      %v877 = vsel %vm327, %v701, %v865
      %v878 = vsel %vm503, %v876, %v871
      %v879 = vsel %vm503, %v877, %v873
      %s880 = scalar_lea.vmem %s235, 32
      %881 = vst.msk [vmem:[%s880] sm:$0xff] %vm506, %v878
      %882 = vst.msk [vmem:[%s880 + $0x8] sm:$0xff] %vm506, %v879
      %s883 = scalar_lea.vmem %s2, 24
      %v884 = vld [vmem:[%s883] sm:$0xff]
      %885 = vrot.lane.b32.xlu0 %v318, 104
      %v886 = vpop.permute.xlu0 %885
      %887 = vrot.lane.b32.xlu0 %v323, 104
      %v888 = vpop.permute.xlu0 %887
      %v889 = vsel %vm327, %v886, 0
      %v891 = vsel %vm327, %v888, 0
      %893 = vmatprep.subr.mxu0 0.0
      %894 = vmatpush1.msra.mxu0 %v884
      %895 = vmatprep.subr.mxu0 0.0
      %896 = vmatpush1.msra.mxu0 0.0
      %897 = vmatprep.subr.mxu0 0.0
      %898 = vmatpush1.msra.mxu0 0.0
      %899 = vmatprep.subr.mxu0 0.0
      %900 = vmatpush1.msra.mxu0 0.0
      %901 = vmatprep.subr.mxu0 0.0
      %902 = vmatpush1.msra.mxu0 0.0
      %903 = vmatprep.subr.mxu0 0.0
      %904 = vmatpush1.msra.mxu0 0.0
      %905 = vmatprep.subr.mxu0 0.0
      %906 = vmatpush1.msra.mxu0 0.0
      %907 = vmatprep.subr.mxu0 0.0
      %908 = vmatpush1.msra.mxu0 0.0
      %909 = vmatprep.subr.mxu0 0.0
      %910 = vmatpush1.msra.mxu0 0.0
      %911 = vmatprep.subr.mxu0 0.0
      %912 = vmatpush1.msra.mxu0 0.0
      %913 = vmatprep.subr.mxu0 0.0
      %914 = vmatpush1.msra.mxu0 0.0
      %915 = vmatprep.subr.mxu0 0.0
      %916 = vmatpush1.msra.mxu0 0.0
      %917 = vmatprep.subr.mxu0 0.0
      %918 = vmatpush1.msra.mxu0 0.0
      %919 = vmatprep.subr.mxu0 0.0
      %920 = vmatpush1.msra.mxu0 0.0
      %921 = vmatprep.subr.mxu0 0.0
      %922 = vmatpush1.msra.mxu0 0.0
      %923 = vmatprep.subr.mxu0 0.0
      %924 = vmatpush1.msra.mxu0 0.0
      %925 = vmatprep.subr.mxu0 0.0
      %926 = vmatpush1.msra.mxu0 0.0
      %927 = vmatprep.subr.mxu0 0.0
      %928 = vmatpush1.msra.mxu0 0.0
      %929 = vmatprep.subr.mxu0 0.0
      %930 = vmatpush1.msra.mxu0 0.0
      %931 = vmatprep.subr.mxu0 0.0
      %932 = vmatpush1.msra.mxu0 0.0
      %933 = vmatprep.subr.mxu0 0.0
      %934 = vmatpush1.msra.mxu0 0.0
      %935 = vmatprep.subr.mxu0 0.0
      %936 = vmatpush1.msra.mxu0 0.0
      %937 = vmatprep.subr.mxu0 0.0
      %938 = vmatpush1.msra.mxu0 0.0
      %939 = vmatprep.subr.mxu0 0.0
      %940 = vmatpush1.msra.mxu0 0.0
      %941 = vmatprep.subr.mxu0 0.0
      %942 = vmatpush1.msra.mxu0 0.0
      %943 = vmatprep.subr.mxu0 0.0
      %944 = vmatpush1.msra.mxu0 0.0
      %945 = vmatprep.subr.mxu0 0.0
      %946 = vmatpush1.msra.mxu0 0.0
      %947 = vmatprep.subr.mxu0 0.0
      %948 = vmatpush1.msra.mxu0 0.0
      %949 = vmatprep.subr.mxu0 0.0
      %950 = vmatpush1.msra.mxu0 0.0
      %951 = vmatprep.subr.mxu0 0.0
      %952 = vmatpush1.msra.mxu0 0.0
      %953 = vmatprep.subr.mxu0 0.0
      %954 = vmatpush1.msra.mxu0 0.0
      %955 = vmatprep.subr.mxu0 0.0
      %956 = vmatpush1.msra.mxu0 0.0
      %957 = vmatprep.mubr.f32.mxu0 0.0
      %958 = vmatmul.mubr.f32.gmra.mrb[0].mxu0 %v889
      %v959 = vpop.f32.mrb[0].mxu0
      %v960 = vadd.f32 0.0, %v959
      %v961 = vpop.f32.mrb[0].mxu0
      %962 = vmatprep.mubr.f32.mxu0 0.0
      %963 = vmatmul.mubr.f32.gmra.mrb[0].mxu0 %v891
      %v964 = vpop.f32.mrb[0].mxu0
      %v965 = vadd.f32 0.0, %v964
      %v966 = vpop.f32.mrb[0].mxu0
      %967 = vdwg.mxu0
      %s968 = scalar_lea.vmem %s3, 24
      %v969 = vld [vmem:[%s968] sm:$0xff]
      %970 = vmatprep.subr.mxu0 0.0
      %971 = vmatpush1.msra.mxu0 %v969
      %972 = vmatprep.subr.mxu0 0.0
      %973 = vmatpush1.msra.mxu0 0.0
      %974 = vmatprep.subr.mxu0 0.0
      %975 = vmatpush1.msra.mxu0 0.0
      %976 = vmatprep.subr.mxu0 0.0
      %977 = vmatpush1.msra.mxu0 0.0
      %978 = vmatprep.subr.mxu0 0.0
      %979 = vmatpush1.msra.mxu0 0.0
      %980 = vmatprep.subr.mxu0 0.0
      %981 = vmatpush1.msra.mxu0 0.0
      %982 = vmatprep.subr.mxu0 0.0
      %983 = vmatpush1.msra.mxu0 0.0
      %984 = vmatprep.subr.mxu0 0.0
      %985 = vmatpush1.msra.mxu0 0.0
      %986 = vmatprep.subr.mxu0 0.0
      %987 = vmatpush1.msra.mxu0 0.0
      %988 = vmatprep.subr.mxu0 0.0
      %989 = vmatpush1.msra.mxu0 0.0
      %990 = vmatprep.subr.mxu0 0.0
      %991 = vmatpush1.msra.mxu0 0.0
      %992 = vmatprep.subr.mxu0 0.0
      %993 = vmatpush1.msra.mxu0 0.0
      %994 = vmatprep.subr.mxu0 0.0
      %995 = vmatpush1.msra.mxu0 0.0
      %996 = vmatprep.subr.mxu0 0.0
      %997 = vmatpush1.msra.mxu0 0.0
      %998 = vmatprep.subr.mxu0 0.0
      %999 = vmatpush1.msra.mxu0 0.0
      %1000 = vmatprep.subr.mxu0 0.0
      %1001 = vmatpush1.msra.mxu0 0.0
      %1002 = vmatprep.subr.mxu0 0.0
      %1003 = vmatpush1.msra.mxu0 0.0
      %1004 = vmatprep.subr.mxu0 0.0
      %1005 = vmatpush1.msra.mxu0 0.0
      %1006 = vmatprep.subr.mxu0 0.0
      %1007 = vmatpush1.msra.mxu0 0.0
      %1008 = vmatprep.subr.mxu0 0.0
      %1009 = vmatpush1.msra.mxu0 0.0
      %1010 = vmatprep.subr.mxu0 0.0
      %1011 = vmatpush1.msra.mxu0 0.0
      %1012 = vmatprep.subr.mxu0 0.0
      %1013 = vmatpush1.msra.mxu0 0.0
      %1014 = vmatprep.subr.mxu0 0.0
      %1015 = vmatpush1.msra.mxu0 0.0
      %1016 = vmatprep.subr.mxu0 0.0
      %1017 = vmatpush1.msra.mxu0 0.0
      %1018 = vmatprep.subr.mxu0 0.0
      %1019 = vmatpush1.msra.mxu0 0.0
      %1020 = vmatprep.subr.mxu0 0.0
      %1021 = vmatpush1.msra.mxu0 0.0
      %1022 = vmatprep.subr.mxu0 0.0
      %1023 = vmatpush1.msra.mxu0 0.0
      %1024 = vmatprep.subr.mxu0 0.0
      %1025 = vmatpush1.msra.mxu0 0.0
      %1026 = vmatprep.subr.mxu0 0.0
      %1027 = vmatpush1.msra.mxu0 0.0
      %1028 = vmatprep.subr.mxu0 0.0
      %1029 = vmatpush1.msra.mxu0 0.0
      %1030 = vmatprep.subr.mxu0 0.0
      %1031 = vmatpush1.msra.mxu0 0.0
      %1032 = vmatprep.subr.mxu0 0.0
      %1033 = vmatpush1.msra.mxu0 0.0
      %1034 = vmatprep.mubr.f32.mxu0 0.0
      %1035 = vmatmul.mubr.f32.gmra.mrb[0].mxu0 %v889
      %v1036 = vpop.f32.mrb[0].mxu0
      %v1037 = vadd.f32 0.0, %v1036
      %v1038 = vpop.f32.mrb[0].mxu0
      %1039 = vmatprep.mubr.f32.mxu0 0.0
      %1040 = vmatmul.mubr.f32.gmra.mrb[0].mxu0 %v891
      %v1041 = vpop.f32.mrb[0].mxu0
      %v1042 = vadd.f32 0.0, %v1041
      %v1043 = vpop.f32.mrb[0].mxu0
      %1044 = vdwg.mxu0
      %1049 = vrot.lane.b32.xlu0 %v960, 8
      %v1050 = vpop.permute.xlu0 %1049
      %1051 = vrot.lane.b32.xlu0 %v965, 8
      %v1052 = vpop.permute.xlu0 %1051
      %1057 = vrot.lane.b32.xlu0 %v1037, 16
      %v1058 = vpop.permute.xlu0 %1057
      %1059 = vrot.lane.b32.xlu0 %v1042, 16
      %v1060 = vpop.permute.xlu0 %1059
      %v1063 = vsel %vm327, %v886, %v1050
      %v1064 = vsel %vm327, %v888, %v1052
      %v1065 = vsel %vm503, %v1063, %v1058
      %v1066 = vsel %vm503, %v1064, %v1060
      %s1067 = scalar_lea.vmem %s235, 48
      %1068 = vst.msk [vmem:[%s1067] sm:$0xff] %vm506, %v1065
      %1069 = vst.msk [vmem:[%s1067 + $0x8] sm:$0xff] %vm506, %v1066
      %s1070 = smul.u32 2, %s20
      %p1071 = scmp.lt.s32.totalorder %s19, 1
      %s1072 = scalar_select %p1071, %s19, 1
      %p1073 = scmp.lt.s32.totalorder %s1070, 1
      %s1074 = scalar_select %p1073, %s1070, 1
      %s1075 = smul.addr %s1072, 8
      %s1076 = sadd.s32 %s1074, %s1075
      %s1077 = smul.addr %s1076, 8
      %s1078 = scalar_lea.vmem %s4, %s1077
      // Predicated region
      $region37: #{_lambda_.2} parent=35 // pred_check
        %p1079 = pneg %p138
      $region38: #{_lambda_.2} parent=35 // pred_check_branch
        %1081 = sbr.rel (%p1079) target = $region40
      $region39: #{_lambda_.2} parent=35 // pred_region
        %s1082 = smul.u32 2, %s20
      $region40: #{_lambda_.2} parent=35 // pred_fallthru
        _
    $region36: #{_lambda_.2} parent=5 // pred_fallthru
      _
    %p1083 = scmp.le.s32.totalorder 2, %s10
    // Predicated region
    $region41: #{_lambda_.2} parent=5 // pred_check
      %p1084 = pneg %p1083
    $region42: #{_lambda_.2} parent=5 // pred_check_branch
      %1086 = sbr.rel (%p1084) target = $region44
    $region43: #{_lambda_.2} parent=5 // pred_region
      %s1087 = ssub.s32 %s10, 2
      // Predicated region
      $region45: #{_lambda_.2} parent=43 // pred_check
        %p1088 = pneg %p144
      $region46: #{_lambda_.2} parent=43 // pred_check_branch
        %1090 = sbr.rel (%p1088) target = $region48
      $region47: #{_lambda_.2} parent=43 // pred_region
        %s1091 = smul.u32 2, %s22
        %p1092 = scmp.lt.s32.totalorder %s21, 1
        %s1093 = scalar_select %p1092, %s21, 1
        %p1094 = scmp.lt.s32.totalorder %s1091, 1
        %s1095 = scalar_select %p1094, %s1091, 1
        %s1096 = smul.addr %s1093, 8
        %s1097 = sadd.s32 %s1095, %s1096
        %s1098 = smul.addr %s1097, 8
        %s1099 = scalar_lea.vmem %s4, %s1098
      $region48: #{_lambda_.2} parent=43 // pred_fallthru
        _
    $region44: #{_lambda_.2} parent=5 // pred_fallthru
      _
  $region6: #{_lambda_.2} parent=0 // loop_footer
    %s14 = sadd.s32 1, %s10
  $region7: #{_lambda_.2} parent=0 // loop_footer_branch
    %9 = sbr.rel target = $region3
  $region8: #{_lambda_.2} parent=0 // loop_exit
    _

</llo_original>
